<compile_context>
chip_gen: v5e
topology: v5e:2x2
jax: 0.10.0
libtpu: 0.0.40
codegen_flags: <defaults>
</compile_context>

<pallas_src>
import numpy as np
import jax
import jax.numpy as jnp
from jax import lax
from jax.experimental import pallas as pl
from jax.experimental.pallas import tpu as pltpu

N_HEADS = 4                      # n_heads
HEAD_DIM = 16                    # hidden_dim (per head)
F_IN = 32                        # input node feature dim
OUT_DIM = N_HEADS * HEAD_DIM     # 64
PACKED_OUT = 2 * OUT_DIM         # 128 lanes: [aggregated rep | transformed dst]
NEG_SLOPE = 0.2                  # LeakyReLU slope for attention scores
MATMUL_DTYPE = jnp.bfloat16      # MXU operand dtype; accumulation stays f32


def _round_up(x, m):
    return ((x + m - 1) // m) * m


# ----------------------------------------------------------------------------
# Pallas kernel: one grid step == one relation (padded to common Ns/Nd)
# ----------------------------------------------------------------------------
def _hetero_gat_kernel(fs_ref, fd_ref, w_ref, b_ref,
                       rw_src_blk_ref, rw_dst_flat_ref,
                       re_src_bc_ref, re_dst_bc_ref,
                       adj_ref, out_ref):
    fs = fs_ref[0]                                   # (Ns, F_IN)  bf16
    fd = fd_ref[0]                                   # (Nd, F_IN)  bf16
    ns = fs.shape[0]

    # ---- fused src+dst feature transform: ONE MXU matmul (bf16 in, f32 acc)
    fsd = jnp.concatenate([fs, fd], axis=0)          # (Ns+Nd, F_IN)
    z = jnp.dot(fsd, w_ref[0], preferred_element_type=jnp.float32) + b_ref[0]
    zs = z[:ns]                                      # (Ns, OUT_DIM) f32
    zd = z[ns:]                                      # (Nd, OUT_DIM) f32

    # ---- relation-conditioned attention params (head-blocked layouts) ------
    # rel_w * rel_emb stays in-kernel; the host only re-laid-out the weights.
    a_src_blk = rw_src_blk_ref[0] * re_src_bc_ref[0]   # (H, OUT_DIM) block-diag
    a_dst_flat = rw_dst_flat_ref[0] * re_dst_bc_ref[0]  # (1, OUT_DIM)

    # Src scores for ALL heads with one dot (also does the sublane->lane move):
    #   es[h, i] = <zs[i, h*D:(h+1)*D], a_src[h]>
    es = lax.dot_general(a_src_blk, zs, (((1,), (1,)), ((), ())),
                         preferred_element_type=jnp.float32)      # (H, Ns)
    # Dst scores on the VPU/XLU only (no MXU):
    #   ed[h, j] = <zd[j, h*D:(h+1)*D], a_dst[h]>
    wd = zd * a_dst_flat                                          # (Nd, OUT_DIM)
    ed3 = jnp.sum(
        jnp.stack([wd[:, h * HEAD_DIM:(h + 1) * HEAD_DIM]
                   for h in range(N_HEADS)], axis=0),
        axis=-1, keepdims=True)                                   # (H, Nd, 1)
    es3 = jnp.stack([es[h:h + 1, :] for h in range(N_HEADS)], axis=0)  # (H, 1, Ns)

    # ---- masked softmax over incoming edges, all heads at once -------------
    adj = adj_ref[0]                                  # (Nd, Ns)
    mask = adj > 0.0
    neg_bias = jnp.where(mask, 0.0, -1e9)             # hoisted out of the head dim
    e = ed3 + es3                                     # (H, Nd, Ns)
    e = jnp.where(e > 0, e, NEG_SLOPE * e)            # LeakyReLU
    e = e + neg_bias[None, :, :]
    m = jnp.max(e, axis=-1, keepdims=True)
    # the mask multiply also zeroes all-masked rows (zero in-degree dst nodes)
    p = jnp.exp(e - m) * mask.astype(jnp.float32)[None, :, :]
    denom = jnp.maximum(jnp.sum(p, axis=-1, keepdims=True), 1e-9)
    alpha = p * pl.reciprocal(denom, approx=True)     # (H, Nd, Ns)

    # ---- neighborhood aggregation: ONE batched MXU dot over heads ----------
    zs3 = jnp.stack([zs[:, h * HEAD_DIM:(h + 1) * HEAD_DIM]
                     for h in range(N_HEADS)], axis=0)              # (H, Ns, D)
    rep3 = lax.dot_general(alpha.astype(MATMUL_DTYPE), zs3.astype(MATMUL_DTYPE),
                           (((2,), (1,)), ((0,), (0,))),
                           preferred_element_type=jnp.float32)      # (H, Nd, D)
    rep = jnp.concatenate([rep3[h] for h in range(N_HEADS)], axis=-1)  # (Nd, OUT)

    # ---- single lane-dense (Nd, 128) store: [rep | transformed dst] --------
    # TODO(synk): feature/attention dropout of the relation sub-module omitted
    #             (eval-mode semantics).
    out_ref[0] = jnp.concatenate([rep, zd], axis=-1).astype(out_ref.dtype)


# ----------------------------------------------------------------------------
# Batched HeteroGraphConv forward (mirrors the PyTorch dispatcher semantics)
# ----------------------------------------------------------------------------
def hetero_graph_conv_forward(canonical_etypes, adjacency, h,
                              relation_embedding,
                              relation_src_node_transformation_layers,
                              relation_transformation_weight):
    rels = list(canonical_etypes)
    num_rel = len(rels)
    ns_pad = _round_up(max(h[s].shape[0] for s, _, _ in rels), 8)
    nd_pad = _round_up(max(h[d].shape[0] for _, _, d in rels), 8)

    fs_l, fd_l, w_l, b_l = [], [], [], []
    rws_l, rwd_l, res_l, red_l, adj_l = [], [], [], [], []
    eye = jnp.eye(N_HEADS, dtype=jnp.float32)
    for (s, e, d) in rels:
        fs, fd = h[s], h[d]
        w, b = relation_src_node_transformation_layers[e]
        rel_w = relation_transformation_weight[e]          # (H, 2*D)
        rel_emb = relation_embedding[e]                    # (1, 2*D)
        adj = adjacency[(s, e, d)]                         # (nd, ns)
        fs_l.append(jnp.pad(fs, ((0, ns_pad - fs.shape[0]), (0, 0))))
        fd_l.append(jnp.pad(fd, ((0, nd_pad - fd.shape[0]), (0, 0))))
        w_l.append(w)
        b_l.append(b)
        # Host-side layout plumbing only (the rel_w * rel_emb product is done
        # in-kernel):
        #   src half of rel_w  -> head-block-diagonal (H, H*D)
        #   dst half of rel_w  -> flat (1, H*D)
        #   rel_emb halves     -> tiled to (1, H*D) to broadcast over heads
        rws_l.append((eye[:, :, None] * rel_w[:, None, :HEAD_DIM])
                     .reshape(N_HEADS, OUT_DIM))
        rwd_l.append(rel_w[:, HEAD_DIM:].reshape(1, OUT_DIM))
        res_l.append(jnp.tile(rel_emb[:, :HEAD_DIM], (1, N_HEADS)))
        red_l.append(jnp.tile(rel_emb[:, HEAD_DIM:], (1, N_HEADS)))
        adj_l.append(jnp.pad(adj, ((0, nd_pad - adj.shape[0]),
                                   (0, ns_pad - adj.shape[1]))))

    fs_all = jnp.stack(fs_l).astype(MATMUL_DTYPE)
    fd_all = jnp.stack(fd_l).astype(MATMUL_DTYPE)
    w_all = jnp.stack(w_l).astype(MATMUL_DTYPE)
    b_all = jnp.stack(b_l)
    rws_all = jnp.stack(rws_l)
    rwd_all = jnp.stack(rwd_l)
    res_all = jnp.stack(res_l)
    red_all = jnp.stack(red_l)
    adj_all = jnp.stack(adj_l)

    # ONE batched "has any edge" check for all relations (replaces the
    # per-relation blocking int(jnp.sum(adj)) round trips).
    has_edges_dev = jnp.any(adj_all > 0.0, axis=(1, 2))

    idx3 = lambda r: (r, 0, 0)
    packed = pl.pallas_call(
        _hetero_gat_kernel,
        out_shape=jax.ShapeDtypeStruct((num_rel, nd_pad, PACKED_OUT),
                                       jnp.float32),
        grid=(num_rel,),
        in_specs=[
            pl.BlockSpec((1, ns_pad, F_IN), idx3),        # feat_src
            pl.BlockSpec((1, nd_pad, F_IN), idx3),        # feat_dst
            pl.BlockSpec((1, F_IN, OUT_DIM), idx3),       # W
            pl.BlockSpec((1, 1, OUT_DIM), idx3),          # bias
            pl.BlockSpec((1, N_HEADS, OUT_DIM), idx3),    # rel_w src (block-diag)
            pl.BlockSpec((1, 1, OUT_DIM), idx3),          # rel_w dst (flat)
            pl.BlockSpec((1, 1, OUT_DIM), idx3),          # rel_emb src (tiled)
            pl.BlockSpec((1, 1, OUT_DIM), idx3),          # rel_emb dst (tiled)
            pl.BlockSpec((1, nd_pad, ns_pad), idx3),      # dense adjacency
        ],
        out_specs=pl.BlockSpec((1, nd_pad, PACKED_OUT), idx3),
        compiler_params=pltpu.CompilerParams(
            dimension_semantics=("parallel",)),           # split over v7x's 2 TCs
    )(fs_all, fd_all, w_all, b_all, rws_all, rwd_all, res_all, red_all, adj_all)

    # single host sync for all relations, issued after the kernel launch
    has_edges = np.asarray(jax.device_get(has_edges_dev))

    outputs = {}
    dst_after = {}
    for r, (s, e, d) in enumerate(rels):
        # "If the relation graph has no edge, the module is not called."
        if not bool(has_edges[r]):
            continue
        nd = h[d].shape[0]
        outputs[(s, e, d)] = packed[r, :nd, :OUT_DIM]
        dst_after[(s, e, d)] = packed[r, :nd, OUT_DIM:]
    return outputs, dst_after


class HeteroGraphConv:
    """Mirrors the PyTorch dispatcher.  In model_y_v3 every relation sub-module
    is the same GAT-style RelationGraphConv, so the per-etype dispatch loop is
    folded into a single grid=(num_relations,) pallas_call."""

    def __init__(self, mods=None):
        self.mods = mods   # kept for API parity with nn.ModuleDict; unused

    def __call__(self, canonical_etypes, adjacency, h, relation_embedding,
                 relation_src_node_transformation_layers,
                 relation_transformation_weight):
        return hetero_graph_conv_forward(
            canonical_etypes, adjacency, h, relation_embedding,
            relation_src_node_transformation_layers,
            relation_transformation_weight)


# ----------------------------------------------------------------------------
# Pure-JAX f32 reference (for correctness check)
# ----------------------------------------------------------------------------
def reference_relation_conv(feat_src, feat_dst, w, b, rel_w, rel_emb, adj):
    zs = feat_src @ w + b
    zd = feat_dst @ w + b
    a = rel_w * rel_emb
    mask = adj > 0
    reps = []
    for hh in range(N_HEADS):
        lo, hi = hh * HEAD_DIM, (hh + 1) * HEAD_DIM
        zs_h, zd_h = zs[:, lo:hi], zd[:, lo:hi]
        es = zs_h @ a[hh, :HEAD_DIM]
        ed = zd_h @ a[hh, HEAD_DIM:]
        e = ed[:, None] + es[None, :]
        e = jnp.where(e > 0, e, NEG_SLOPE * e)
        e = jnp.where(mask, e, -1e9)
        p = jnp.exp(e - jnp.max(e, axis=-1, keepdims=True)) * mask
        alpha = p / jnp.maximum(jnp.sum(p, axis=-1, keepdims=True), 1e-9)
        reps.append(alpha @ zs_h)
    return jnp.concatenate(reps, axis=-1), zd


# ----------------------------------------------------------------------------
# Demo / test
# ----------------------------------------------------------------------------
if __name__ == "__main__":
    key = jax.random.PRNGKey(0)

    node_counts = {"user": 8, "item": 16, "tag": 8}
    canonical_etypes = [
        ("user", "buys", "item"),
        ("item", "bought-by", "user"),
        ("item", "has", "tag"),
        ("user", "follows", "user"),   # empty relation -> must be skipped
    ]

    # node features h[ntype]: (N_ntype, F_IN)
    h = {}
    for ntype, n in node_counts.items():
        key, k = jax.random.split(key)
        h[ntype] = jax.random.normal(k, (n, F_IN), jnp.float32)

    # dense relation adjacency masks (N_dst, N_src)
    adjacency = {}
    for (stype, etype, dtype) in canonical_etypes:
        nd, ns = node_counts[dtype], node_counts[stype]
        if etype == "follows":
            adjacency[(stype, etype, dtype)] = jnp.zeros((nd, ns), jnp.float32)
        else:
            key, k = jax.random.split(key)
            adjacency[(stype, etype, dtype)] = jax.random.bernoulli(
                k, 0.4, (nd, ns)).astype(jnp.float32)

    # deterministic per-etype parameters
    relation_src_node_transformation_layers = {}
    relation_embedding = {}
    relation_transformation_weight = {}
    for (_, etype, _) in canonical_etypes:
        key, kw, kb, ke, kr = jax.random.split(key, 5)
        relation_src_node_transformation_layers[etype] = (
            jax.random.normal(kw, (F_IN, OUT_DIM), jnp.float32) * 0.1,
            jax.random.normal(kb, (1, OUT_DIM), jnp.float32) * 0.1,
        )
        relation_embedding[etype] = jax.random.normal(
            ke, (1, 2 * HEAD_DIM), jnp.float32)
        relation_transformation_weight[etype] = jax.random.normal(
            kr, (N_HEADS, 2 * HEAD_DIM), jnp.float32) * 0.1

    conv = HeteroGraphConv()

    outputs, dst_after = conv(
        canonical_etypes, adjacency, h, relation_embedding,
        relation_src_node_transformation_layers, relation_transformation_weight)

    for v in outputs.values():
        jax.block_until_ready(v)
    for v in dst_after.values():
        jax.block_until_ready(v)

    # skipped empty relation
    assert ("user", "follows", "user") not in outputs
    assert len(outputs) == 3 and len(dst_after) == 3

    # correctness vs pure-f32 reference (bf16 MXU operands -> looser tolerance)
    for (stype, etype, dtype) in canonical_etypes:
        if etype == "follows":
            continue
        w, b = relation_src_node_transformation_layers[etype]
        ref_rep, ref_trans = reference_relation_conv(
            h[stype], h[dtype], w, b,
            relation_transformation_weight[etype],
            relation_embedding[etype],
            adjacency[(stype, etype, dtype)])
        np.testing.assert_allclose(np.asarray(outputs[(stype, etype, dtype)]),
                                   np.asarray(ref_rep), rtol=2e-2, atol=2e-2)
        np.testing.assert_allclose(np.asarray(dst_after[(stype, etype, dtype)]),
                                   np.asarray(ref_trans), rtol=2e-2, atol=2e-2)

    print("KERNEL_OK")
</pallas_src>

<mosaic_0001>
module attributes {stable_mosaic.version = 11 : i64} {
  func.func @_hetero_gat_kernel(%arg0: i32, %arg1: memref<1x16x32xbf16, #tpu.memory_space<vmem>>, %arg2: memref<1x16x32xbf16, #tpu.memory_space<vmem>>, %arg3: memref<1x32x64xbf16, #tpu.memory_space<vmem>>, %arg4: memref<1x1x64xf32, #tpu.memory_space<vmem>>, %arg5: memref<1x4x64xf32, #tpu.memory_space<vmem>>, %arg6: memref<1x1x64xf32, #tpu.memory_space<vmem>>, %arg7: memref<1x1x64xf32, #tpu.memory_space<vmem>>, %arg8: memref<1x1x64xf32, #tpu.memory_space<vmem>>, %arg9: memref<1x16x16xf32, #tpu.memory_space<vmem>>, %arg10: memref<1x16x128xf32, #tpu.memory_space<vmem>>) attributes {dimension_semantics = [#tpu.dimension_semantics<parallel>], iteration_bounds = array<i64: 4>, scalar_prefetch = 0 : i64, scratch_operands = 0 : i64, tpu.core_type = #tpu.core_type<tc>, window_params = [{transform_indices = @transform_0, window_bounds = array<i64: 1, 16, 32>}, {transform_indices = @transform_1, window_bounds = array<i64: 1, 16, 32>}, {transform_indices = @transform_2, window_bounds = array<i64: 1, 32, 64>}, {transform_indices = @transform_3, window_bounds = array<i64: 1, 1, 64>}, {transform_indices = @transform_4, window_bounds = array<i64: 1, 4, 64>}, {transform_indices = @transform_5, window_bounds = array<i64: 1, 1, 64>}, {transform_indices = @transform_6, window_bounds = array<i64: 1, 1, 64>}, {transform_indices = @transform_7, window_bounds = array<i64: 1, 1, 64>}, {transform_indices = @transform_8, window_bounds = array<i64: 1, 16, 16>}, {transform_indices = @transform_9, window_bounds = array<i64: 1, 16, 128>}]} {
    %c0 = arith.constant 0 : index
    %c0_0 = arith.constant 0 : index
    %c0_1 = arith.constant 0 : index
    %0 = vector.load %arg1[%c0, %c0_0, %c0_1] : memref<1x16x32xbf16, #tpu.memory_space<vmem>>, vector<1x16x32xbf16>
    %1 = vector.shape_cast %0 : vector<1x16x32xbf16> to vector<16x32xbf16>
    %c0_2 = arith.constant 0 : index
    %c0_3 = arith.constant 0 : index
    %c0_4 = arith.constant 0 : index
    %2 = vector.load %arg2[%c0_2, %c0_3, %c0_4] : memref<1x16x32xbf16, #tpu.memory_space<vmem>>, vector<1x16x32xbf16>
    %3 = vector.shape_cast %2 : vector<1x16x32xbf16> to vector<16x32xbf16>
    %4 = tpu.concatenate %1, %3 in 0 : vector<16x32xbf16>, vector<16x32xbf16> -> vector<32x32xbf16>
    %c0_5 = arith.constant 0 : index
    %c0_6 = arith.constant 0 : index
    %c0_7 = arith.constant 0 : index
    %5 = vector.load %arg3[%c0_5, %c0_6, %c0_7] : memref<1x32x64xbf16, #tpu.memory_space<vmem>>, vector<1x32x64xbf16>
    %6 = vector.shape_cast %5 : vector<1x32x64xbf16> to vector<32x64xbf16>
    %cst = arith.constant dense<0.000000e+00> : vector<32x64xf32>
    %7 = tpu.matmul %4, %6, %cst {dimension_numbers = #tpu.dot_dimension_numbers<[1], [0], [0], [1], [0, 0, 1, 1], [], []>} : vector<32x32xbf16>, vector<32x64xbf16>, vector<32x64xf32> -> vector<32x64xf32>
    %c0_8 = arith.constant 0 : index
    %c0_9 = arith.constant 0 : index
    %c0_10 = arith.constant 0 : index
    %8 = vector.load %arg4[%c0_8, %c0_9, %c0_10] : memref<1x1x64xf32, #tpu.memory_space<vmem>>, vector<1x1x64xf32>
    %9 = vector.shape_cast %8 : vector<1x1x64xf32> to vector<1x64xf32>
    %10 = vector.broadcast %9 : vector<1x64xf32> to vector<32x64xf32>
    %11 = arith.addf %7, %10 : vector<32x64xf32>
    %12 = vector.extract_strided_slice %11 {offsets = [0, 0], sizes = [16, 64], strides = [1, 1]} : vector<32x64xf32> to vector<16x64xf32>
    %13 = vector.extract_strided_slice %11 {offsets = [16, 0], sizes = [16, 64], strides = [1, 1]} : vector<32x64xf32> to vector<16x64xf32>
    %c0_11 = arith.constant 0 : index
    %c0_12 = arith.constant 0 : index
    %c0_13 = arith.constant 0 : index
    %14 = vector.load %arg5[%c0_11, %c0_12, %c0_13] : memref<1x4x64xf32, #tpu.memory_space<vmem>>, vector<1x4x64xf32>
    %15 = vector.shape_cast %14 : vector<1x4x64xf32> to vector<4x64xf32>
    %c0_14 = arith.constant 0 : index
    %c0_15 = arith.constant 0 : index
    %c0_16 = arith.constant 0 : index
    %16 = vector.load %arg7[%c0_14, %c0_15, %c0_16] : memref<1x1x64xf32, #tpu.memory_space<vmem>>, vector<1x1x64xf32>
    %17 = vector.shape_cast %16 : vector<1x1x64xf32> to vector<1x64xf32>
    %18 = vector.broadcast %17 : vector<1x64xf32> to vector<4x64xf32>
    %19 = arith.mulf %15, %18 : vector<4x64xf32>
    %c0_17 = arith.constant 0 : index
    %c0_18 = arith.constant 0 : index
    %c0_19 = arith.constant 0 : index
    %20 = vector.load %arg6[%c0_17, %c0_18, %c0_19] : memref<1x1x64xf32, #tpu.memory_space<vmem>>, vector<1x1x64xf32>
    %21 = vector.shape_cast %20 : vector<1x1x64xf32> to vector<1x64xf32>
    %c0_20 = arith.constant 0 : index
    %c0_21 = arith.constant 0 : index
    %c0_22 = arith.constant 0 : index
    %22 = vector.load %arg8[%c0_20, %c0_21, %c0_22] : memref<1x1x64xf32, #tpu.memory_space<vmem>>, vector<1x1x64xf32>
    %23 = vector.shape_cast %22 : vector<1x1x64xf32> to vector<1x64xf32>
    %24 = arith.mulf %21, %23 : vector<1x64xf32>
    %cst_23 = arith.constant dense<0.000000e+00> : vector<4x16xf32>
    %25 = tpu.matmul %19, %12, %cst_23 {dimension_numbers = #tpu.dot_dimension_numbers<[1], [1], [0], [0], [0, 0, 1, 0], [], []>} : vector<4x64xf32>, vector<16x64xf32>, vector<4x16xf32> -> vector<4x16xf32>
    %26 = vector.broadcast %24 : vector<1x64xf32> to vector<16x64xf32>
    %27 = arith.mulf %13, %26 : vector<16x64xf32>
    %28 = vector.extract_strided_slice %27 {offsets = [0, 0], sizes = [16, 16], strides = [1, 1]} : vector<16x64xf32> to vector<16x16xf32>
    %29 = vector.extract_strided_slice %27 {offsets = [0, 16], sizes = [16, 16], strides = [1, 1]} : vector<16x64xf32> to vector<16x16xf32>
    %30 = vector.extract_strided_slice %27 {offsets = [0, 32], sizes = [16, 16], strides = [1, 1]} : vector<16x64xf32> to vector<16x16xf32>
    %31 = vector.extract_strided_slice %27 {offsets = [0, 48], sizes = [16, 16], strides = [1, 1]} : vector<16x64xf32> to vector<16x16xf32>
    %32 = vector.shape_cast %28 : vector<16x16xf32> to vector<1x16x16xf32>
    %33 = vector.shape_cast %29 : vector<16x16xf32> to vector<1x16x16xf32>
    %34 = vector.shape_cast %30 : vector<16x16xf32> to vector<1x16x16xf32>
    %35 = vector.shape_cast %31 : vector<16x16xf32> to vector<1x16x16xf32>
    %36 = tpu.concatenate %32, %33, %34, %35 in 0 : vector<1x16x16xf32>, vector<1x16x16xf32>, vector<1x16x16xf32>, vector<1x16x16xf32> -> vector<4x16x16xf32>
    %cst_24 = arith.constant dense<0.000000e+00> : vector<4x16xf32>
    %37 = vector.multi_reduction <add>, %36, %cst_24 [2] : vector<4x16x16xf32> to vector<4x16xf32>
    %38 = vector.shape_cast %37 : vector<4x16xf32> to vector<4x16x1xf32>
    %39 = vector.extract_strided_slice %25 {offsets = [0, 0], sizes = [1, 16], strides = [1, 1]} : vector<4x16xf32> to vector<1x16xf32>
    %40 = vector.extract_strided_slice %25 {offsets = [1, 0], sizes = [1, 16], strides = [1, 1]} : vector<4x16xf32> to vector<1x16xf32>
    %41 = vector.extract_strided_slice %25 {offsets = [2, 0], sizes = [1, 16], strides = [1, 1]} : vector<4x16xf32> to vector<1x16xf32>
    %42 = vector.extract_strided_slice %25 {offsets = [3, 0], sizes = [1, 16], strides = [1, 1]} : vector<4x16xf32> to vector<1x16xf32>
    %43 = vector.shape_cast %39 : vector<1x16xf32> to vector<1x1x16xf32>
    %44 = vector.shape_cast %40 : vector<1x16xf32> to vector<1x1x16xf32>
    %45 = vector.shape_cast %41 : vector<1x16xf32> to vector<1x1x16xf32>
    %46 = vector.shape_cast %42 : vector<1x16xf32> to vector<1x1x16xf32>
    %47 = tpu.concatenate %43, %44, %45, %46 in 0 : vector<1x1x16xf32>, vector<1x1x16xf32>, vector<1x1x16xf32>, vector<1x1x16xf32> -> vector<4x1x16xf32>
    %c0_25 = arith.constant 0 : index
    %c0_26 = arith.constant 0 : index
    %c0_27 = arith.constant 0 : index
    %48 = vector.load %arg9[%c0_25, %c0_26, %c0_27] : memref<1x16x16xf32, #tpu.memory_space<vmem>>, vector<1x16x16xf32>
    %49 = vector.shape_cast %48 : vector<1x16x16xf32> to vector<16x16xf32>
    %cst_28 = arith.constant 0.000000e+00 : f32
    %50 = vector.broadcast %cst_28 : f32 to vector<16x16xf32>
    %51 = arith.cmpf ogt, %49, %50 : vector<16x16xf32>
    %cst_29 = arith.constant 0.000000e+00 : f32
    %cst_30 = arith.constant -1.000000e+09 : f32
    %52 = vector.broadcast %cst_29 : f32 to vector<16x16xf32>
    %53 = vector.broadcast %cst_30 : f32 to vector<16x16xf32>
    %54 = arith.select %51, %52, %53 : vector<16x16xi1>, vector<16x16xf32>
    %55 = vector.broadcast %38 : vector<4x16x1xf32> to vector<4x16x16xf32>
    %56 = vector.broadcast %47 : vector<4x1x16xf32> to vector<4x16x16xf32>
    %57 = arith.addf %55, %56 : vector<4x16x16xf32>
    %cst_31 = arith.constant 0.000000e+00 : f32
    %58 = vector.broadcast %cst_31 : f32 to vector<4x16x16xf32>
    %59 = arith.cmpf ogt, %57, %58 : vector<4x16x16xf32>
    %cst_32 = arith.constant 2.000000e-01 : f32
    %60 = vector.broadcast %cst_32 : f32 to vector<4x16x16xf32>
    %61 = arith.mulf %60, %57 : vector<4x16x16xf32>
    %62 = arith.select %59, %57, %61 : vector<4x16x16xi1>, vector<4x16x16xf32>
    %63 = vector.shape_cast %54 : vector<16x16xf32> to vector<1x16x16xf32>
    %64 = vector.broadcast %63 : vector<1x16x16xf32> to vector<4x16x16xf32>
    %65 = arith.addf %62, %64 : vector<4x16x16xf32>
    %cst_33 = arith.constant dense<0xFF800000> : vector<4x16xf32>
    %66 = vector.multi_reduction <maximumf>, %65, %cst_33 [2] : vector<4x16x16xf32> to vector<4x16xf32>
    %67 = vector.shape_cast %66 : vector<4x16xf32> to vector<4x16x1xf32>
    %68 = vector.broadcast %67 : vector<4x16x1xf32> to vector<4x16x16xf32>
    %69 = arith.subf %65, %68 : vector<4x16x16xf32>
    %70 = math.exp %69 : vector<4x16x16xf32>
    %71 = arith.extui %51 : vector<16x16xi1> to vector<16x16xi32>
    %72 = arith.sitofp %71 : vector<16x16xi32> to vector<16x16xf32>
    %73 = vector.shape_cast %72 : vector<16x16xf32> to vector<1x16x16xf32>
    %74 = vector.broadcast %73 : vector<1x16x16xf32> to vector<4x16x16xf32>
    %75 = arith.mulf %70, %74 : vector<4x16x16xf32>
    %cst_34 = arith.constant dense<0.000000e+00> : vector<4x16xf32>
    %76 = vector.multi_reduction <add>, %75, %cst_34 [2] : vector<4x16x16xf32> to vector<4x16xf32>
    %77 = vector.shape_cast %76 : vector<4x16xf32> to vector<4x16x1xf32>
    %cst_35 = arith.constant 9.99999971E-10 : f32
    %78 = vector.broadcast %cst_35 : f32 to vector<4x16x1xf32>
    %79 = arith.maximumf %77, %78 : vector<4x16x1xf32>
    %80 = tpu.reciprocal %79 {approx = true} : vector<4x16x1xf32> -> vector<4x16x1xf32>
    %81 = vector.broadcast %80 : vector<4x16x1xf32> to vector<4x16x16xf32>
    %82 = arith.mulf %75, %81 : vector<4x16x16xf32>
    %83 = vector.extract_strided_slice %12 {offsets = [0, 0], sizes = [16, 16], strides = [1, 1]} : vector<16x64xf32> to vector<16x16xf32>
    %84 = vector.extract_strided_slice %12 {offsets = [0, 16], sizes = [16, 16], strides = [1, 1]} : vector<16x64xf32> to vector<16x16xf32>
    %85 = vector.extract_strided_slice %12 {offsets = [0, 32], sizes = [16, 16], strides = [1, 1]} : vector<16x64xf32> to vector<16x16xf32>
    %86 = vector.extract_strided_slice %12 {offsets = [0, 48], sizes = [16, 16], strides = [1, 1]} : vector<16x64xf32> to vector<16x16xf32>
    %87 = vector.shape_cast %83 : vector<16x16xf32> to vector<1x16x16xf32>
    %88 = vector.shape_cast %84 : vector<16x16xf32> to vector<1x16x16xf32>
    %89 = vector.shape_cast %85 : vector<16x16xf32> to vector<1x16x16xf32>
    %90 = vector.shape_cast %86 : vector<16x16xf32> to vector<1x16x16xf32>
    %91 = tpu.concatenate %87, %88, %89, %90 in 0 : vector<1x16x16xf32>, vector<1x16x16xf32>, vector<1x16x16xf32>, vector<1x16x16xf32> -> vector<4x16x16xf32>
    %92 = arith.truncf %82 : vector<4x16x16xf32> to vector<4x16x16xbf16>
    %93 = arith.truncf %91 : vector<4x16x16xf32> to vector<4x16x16xbf16>
    %cst_36 = arith.constant dense<0.000000e+00> : vector<4x16x16xf32>
    %94 = tpu.matmul %92, %93, %cst_36 {dimension_numbers = #tpu.dot_dimension_numbers<[2], [1], [1], [2], [0, 0, 0, 1, 1, 2], [0], [0]>} : vector<4x16x16xbf16>, vector<4x16x16xbf16>, vector<4x16x16xf32> -> vector<4x16x16xf32>
    %95 = vector.extract_strided_slice %94 {offsets = [0, 0, 0], sizes = [1, 16, 16], strides = [1, 1, 1]} : vector<4x16x16xf32> to vector<1x16x16xf32>
    %96 = vector.shape_cast %95 : vector<1x16x16xf32> to vector<16x16xf32>
    %97 = vector.extract_strided_slice %94 {offsets = [1, 0, 0], sizes = [1, 16, 16], strides = [1, 1, 1]} : vector<4x16x16xf32> to vector<1x16x16xf32>
    %98 = vector.shape_cast %97 : vector<1x16x16xf32> to vector<16x16xf32>
    %99 = vector.extract_strided_slice %94 {offsets = [2, 0, 0], sizes = [1, 16, 16], strides = [1, 1, 1]} : vector<4x16x16xf32> to vector<1x16x16xf32>
    %100 = vector.shape_cast %99 : vector<1x16x16xf32> to vector<16x16xf32>
    %101 = vector.extract_strided_slice %94 {offsets = [3, 0, 0], sizes = [1, 16, 16], strides = [1, 1, 1]} : vector<4x16x16xf32> to vector<1x16x16xf32>
    %102 = vector.shape_cast %101 : vector<1x16x16xf32> to vector<16x16xf32>
    %103 = tpu.concatenate %96, %98, %100, %102 in 1 : vector<16x16xf32>, vector<16x16xf32>, vector<16x16xf32>, vector<16x16xf32> -> vector<16x64xf32>
    %104 = tpu.concatenate %103, %13 in 1 : vector<16x64xf32>, vector<16x64xf32> -> vector<16x128xf32>
    %c0_37 = arith.constant 0 : index
    %c0_38 = arith.constant 0 : index
    %c0_39 = arith.constant 0 : index
    %105 = vector.load %arg10[%c0_37, %c0_38, %c0_39] : memref<1x16x128xf32, #tpu.memory_space<vmem>>, vector<1x16x128xf32>
    %106 = vector.shape_cast %105 : vector<1x16x128xf32> to vector<16x128xf32>
    %107 = vector.shape_cast %104 : vector<16x128xf32> to vector<1x16x128xf32>
    tpu.vector_store %arg10[%c0_37, %c0_38, %c0_39], %107 {strides = array<i32>} : memref<1x16x128xf32, #tpu.memory_space<vmem>>, vector<1x16x128xf32>,
    return
  }
  func.func @transform_0(%arg0: i32) -> (i32, i32, i32) {
    %c0_i32 = arith.constant 0 : i32
    %c0_i32_0 = arith.constant 0 : i32
    %c0_i32_1 = arith.constant 0 : i32
    return %arg0, %c0_i32, %c0_i32_0 : i32, i32, i32
  }
  func.func @transform_1(%arg0: i32) -> (i32, i32, i32) {
    %c0_i32 = arith.constant 0 : i32
    %c0_i32_0 = arith.constant 0 : i32
    %c0_i32_1 = arith.constant 0 : i32
    return %arg0, %c0_i32, %c0_i32_0 : i32, i32, i32
  }
  func.func @transform_2(%arg0: i32) -> (i32, i32, i32) {
    %c0_i32 = arith.constant 0 : i32
    %c0_i32_0 = arith.constant 0 : i32
    %c0_i32_1 = arith.constant 0 : i32
    return %arg0, %c0_i32, %c0_i32_0 : i32, i32, i32
  }
  func.func @transform_3(%arg0: i32) -> (i32, i32, i32) {
    %c0_i32 = arith.constant 0 : i32
    %c0_i32_0 = arith.constant 0 : i32
    %c0_i32_1 = arith.constant 0 : i32
    return %arg0, %c0_i32, %c0_i32_0 : i32, i32, i32
  }
  func.func @transform_4(%arg0: i32) -> (i32, i32, i32) {
    %c0_i32 = arith.constant 0 : i32
    %c0_i32_0 = arith.constant 0 : i32
    %c0_i32_1 = arith.constant 0 : i32
    return %arg0, %c0_i32, %c0_i32_0 : i32, i32, i32
  }
  func.func @transform_5(%arg0: i32) -> (i32, i32, i32) {
    %c0_i32 = arith.constant 0 : i32
    %c0_i32_0 = arith.constant 0 : i32
    %c0_i32_1 = arith.constant 0 : i32
    return %arg0, %c0_i32, %c0_i32_0 : i32, i32, i32
  }
  func.func @transform_6(%arg0: i32) -> (i32, i32, i32) {
    %c0_i32 = arith.constant 0 : i32
    %c0_i32_0 = arith.constant 0 : i32
    %c0_i32_1 = arith.constant 0 : i32
    return %arg0, %c0_i32, %c0_i32_0 : i32, i32, i32
  }
  func.func @transform_7(%arg0: i32) -> (i32, i32, i32) {
    %c0_i32 = arith.constant 0 : i32
    %c0_i32_0 = arith.constant 0 : i32
    %c0_i32_1 = arith.constant 0 : i32
    return %arg0, %c0_i32, %c0_i32_0 : i32, i32, i32
  }
  func.func @transform_8(%arg0: i32) -> (i32, i32, i32) {
    %c0_i32 = arith.constant 0 : i32
    %c0_i32_0 = arith.constant 0 : i32
    %c0_i32_1 = arith.constant 0 : i32
    return %arg0, %c0_i32, %c0_i32_0 : i32, i32, i32
  }
  func.func @transform_9(%arg0: i32) -> (i32, i32, i32) {
    %c0_i32 = arith.constant 0 : i32
    %c0_i32_0 = arith.constant 0 : i32
    %c0_i32_1 = arith.constant 0 : i32
    return %arg0, %c0_i32, %c0_i32_0 : i32, i32, i32
  }
}

</mosaic_0001>

<llo_original>
// kernel: tpu_custom_call.1
$region0: #{tpu_custom_call.1}
  #allocation0 [shape = 'u32[]', space=smem, size = 0x4, offset = 0x4, fixed_abs, tag = 'smem constant byte address 0x4 - core index']
  #allocation1 [shape = 'u32[72,128]{1,0:T(1,128)}', space=vmem, size = 0x9000, scoped, tag = 'internal scratch']
  %s0 = inlined_call_operand.hbm [shape: bf16[4,16,32], index: 0, kind: input, shape index: {}]
  %s1 = inlined_call_operand.hbm [shape: bf16[4,16,32], index: 1, kind: input, shape index: {}]
  %s2 = inlined_call_operand.hbm [shape: bf16[4,32,64], index: 2, kind: input, shape index: {}]
  %s3 = inlined_call_operand.hbm [shape: f32[4,1,64], index: 3, kind: input, shape index: {}]
  %s4 = inlined_call_operand.hbm [shape: f32[4,4,64], index: 4, kind: input, shape index: {}]
  %s5 = inlined_call_operand.vmem [shape: f32[4,1,64], index: 5, kind: input, shape index: {}]
  %s6 = inlined_call_operand.hbm [shape: f32[4,1,64], index: 6, kind: input, shape index: {}]
  %s7 = inlined_call_operand.hbm [shape: f32[4,1,64], index: 7, kind: input, shape index: {}]
  %s8 = inlined_call_operand.hbm [shape: f32[4,16,16], index: 8, kind: input, shape index: {}]
  %s9 = inlined_call_operand.hbm [shape: f32[4,16,128], index: 9, kind: output, shape index: {}]
  %s10 = sld [smem:[#allocation0]]
  $region101: #{tpu_custom_call.1} parent=0
    _
  %s12 = ssub.s32 1, %s10
  %s13 = scalar_select 0, %s12, %s10
  $region1: #{tpu_custom_call.1} parent=0
    #allocation2 [shape = 'u8[8192]{0}', space=vmem, size = 0x2000, scoped, tag = 'input window, operand 0']
    #allocation3 [shape = 's32[2]{0}', space=sflag, size = 0x8, scoped, tag = 'scoped memory for tpu_custom_call.1']
    #allocation4 [shape = 's32[2]{0}', space=sflag, size = 0x8, scoped, tag = 'scoped memory for tpu_custom_call.1']
    #allocation5 [shape = 'u8[8192]{0}', space=vmem, size = 0x2000, scoped, tag = 'input window, operand 1']
    #allocation6 [shape = 's32[2]{0}', space=sflag, size = 0x8, scoped, tag = 'scoped memory for tpu_custom_call.1']
    #allocation7 [shape = 'u8[16384]{0}', space=vmem, size = 0x4000, scoped, tag = 'input window, operand 2']
    #allocation8 [shape = 'u8[1024]{0}', space=vmem, size = 0x400, scoped, tag = 'input window, operand 3']
    #allocation9 [shape = 's32[2]{0}', space=sflag, size = 0x8, scoped, tag = 'scoped memory for tpu_custom_call.1']
    #allocation10 [shape = 'u8[4096]{0}', space=vmem, size = 0x1000, scoped, tag = 'input window, operand 4']
    #allocation11 [shape = 'u8[1024]{0}', space=vmem, size = 0x400, scoped, tag = 'input window, operand 6']
    #allocation12 [shape = 's32[2]{0}', space=sflag, size = 0x8, scoped, tag = 'scoped memory for tpu_custom_call.1']
    #allocation13 [shape = 'u8[1024]{0}', space=vmem, size = 0x400, scoped, tag = 'input window, operand 7']
    #allocation14 [shape = 'u8[16384]{0}', space=vmem, size = 0x4000, scoped, tag = 'input window, operand 8']
    #allocation15 [shape = 's32[2]{0}', space=sflag, size = 0x8, scoped, tag = 'scoped memory for tpu_custom_call.1']
    #allocation16 [shape = 'u8[16384]{0}', space=vmem, size = 0x4000, scoped, tag = 'output window, operand 0']
    %14 = vsyncpa [#allocation3], 0
    %s15 = scalar_lea.sflag [#allocation3], 1
    %16 = vsyncpa %s15, 0
    %17 = vsyncpa [#allocation6], 0
    %s18 = scalar_lea.sflag [#allocation6], 1
    %19 = vsyncpa %s18, 0
    %20 = vsyncpa [#allocation9], 0
    %s21 = scalar_lea.sflag [#allocation9], 1
    %22 = vsyncpa %s21, 0
    %23 = vsyncpa [#allocation12], 0
    %s24 = scalar_lea.sflag [#allocation12], 1
    %25 = vsyncpa %s24, 0
    %26 = vsyncpa [#allocation15], 0
    %s27 = scalar_lea.sflag [#allocation15], 1
    %28 = vsyncpa %s27, 0
    %29 = vsyncpa [#allocation4], 0
    %s30 = scalar_lea.sflag [#allocation4], 1
    %31 = vsyncpa %s30, 0
    loop: start=0, step=1, limit=6
    $region2: #{tpu_custom_call.1} parent=1 // loop_pre_header
      _
    $region3: #{tpu_custom_call.1} parent=1 // loop_header
      %s33 = sphi 0, %s37
      %p34 = scmp.ge.s32.totalorder %s33, 6
      %s43 = sphi 0, %s45
      %s46 = sphi 0, %s43
      %s47 = sphi 0, %s46
      %s63 = sphi 0, %s47
      %s69 = sphi 0, %s71
      %s72 = sphi 0, %s69
      %s73 = sphi 0, %s72
      %s89 = sphi 0, %s73
      %s95 = sphi 0, %s97
      %s98 = sphi 0, %s95
      %s99 = sphi 0, %s98
      %s115 = sphi 0, %s99
      %s121 = sphi 0, %s123
      %s124 = sphi 0, %s121
      %s125 = sphi 0, %s124
      %s141 = sphi 0, %s125
      %s147 = sphi 0, %s149
      %s150 = sphi 0, %s147
      %s151 = sphi 0, %s150
      %s167 = sphi 0, %s151
      %s173 = sphi 0, %s175
      %s176 = sphi 0, %s173
      %s177 = sphi 0, %s176
      %s193 = sphi 0, %s177
      %s199 = sphi 0, %s201
      %s202 = sphi 0, %s199
      %s203 = sphi 0, %s202
      %s219 = sphi 0, %s203
      %s225 = sphi 0, %s227
      %s228 = sphi 0, %s225
      %s229 = sphi 0, %s228
      %s245 = sphi 0, %s229
      %s251 = sphi 0, %s253
      %s254 = sphi 0, %s251
      %s255 = sphi 0, %s254
      %s271 = sphi 0, %s255
      %s277 = sphi 0, %s279
      %s280 = sphi 0, %s277
      %s281 = sphi 0, %s280
      %s297 = sphi 0, %s281
    $region4: #{tpu_custom_call.1} parent=1 // loop_header_branch
      %36 = sbr.rel (%p34) target = $region8
    $region5: #{tpu_custom_call.1} parent=1 // loop_body
      %s38 = ssub.s32 %s33, 1
      %s39 = ssub.s32 %s33, 2
      %s40 = sadd.s32 %s33, 1
      %s41 = ssub.s32 %s33, %s40
      %p42 = scmp.eq.s32.totalorder %s41, 0
      %s44 = sadd.s32 %s43, 1
      %s45 = scalar_select %p42, %s43, %s44
      %p48 = pneg %p42
      %p49 = scmp.eq.s32.totalorder %s33, 3
      %p50 = por %p48, %p49
      %p51 = scmp.ne.s32.totalorder %s43, %s46
      %p52 = scmp.eq.s32.totalorder %s33, 0
      %p53 = por %p51, %p52
      %p54 = scmp.ne.s32.totalorder %s43, %s46
      %p55 = scmp.eq.s32.totalorder %s38, 3
      %p56 = por %p54, %p55
      %p57 = scmp.ne.s32.totalorder %s46, %s47
      %p58 = scmp.eq.s32.totalorder %s38, 0
      %p59 = por %p57, %p58
      %p60 = scmp.ne.s32.totalorder %s46, %s47
      %p61 = scmp.eq.s32.totalorder %s39, 3
      %p62 = por %p60, %p61
      %p64 = scmp.ne.s32.totalorder %s47, %s63
      %p65 = scmp.eq.s32.totalorder %s39, 0
      %p66 = por %p64, %p65
      %s67 = ssub.s32 %s33, %s40
      %p68 = scmp.eq.s32.totalorder %s67, 0
      %s70 = sadd.s32 %s69, 1
      %s71 = scalar_select %p68, %s69, %s70
      %p74 = pneg %p68
      %p75 = scmp.eq.s32.totalorder %s33, 3
      %p76 = por %p74, %p75
      %p77 = scmp.ne.s32.totalorder %s69, %s72
      %p78 = scmp.eq.s32.totalorder %s33, 0
      %p79 = por %p77, %p78
      %p80 = scmp.ne.s32.totalorder %s69, %s72
      %p81 = scmp.eq.s32.totalorder %s38, 3
      %p82 = por %p80, %p81
      %p83 = scmp.ne.s32.totalorder %s72, %s73
      %p84 = scmp.eq.s32.totalorder %s38, 0
      %p85 = por %p83, %p84
      %p86 = scmp.ne.s32.totalorder %s72, %s73
      %p87 = scmp.eq.s32.totalorder %s39, 3
      %p88 = por %p86, %p87
      %p90 = scmp.ne.s32.totalorder %s73, %s89
      %p91 = scmp.eq.s32.totalorder %s39, 0
      %p92 = por %p90, %p91
      %s93 = ssub.s32 %s33, %s40
      %p94 = scmp.eq.s32.totalorder %s93, 0
      %s96 = sadd.s32 %s95, 1
      %s97 = scalar_select %p94, %s95, %s96
      %p100 = pneg %p94
      %p101 = scmp.eq.s32.totalorder %s33, 3
      %p102 = por %p100, %p101
      %p103 = scmp.ne.s32.totalorder %s95, %s98
      %p104 = scmp.eq.s32.totalorder %s33, 0
      %p105 = por %p103, %p104
      %p106 = scmp.ne.s32.totalorder %s95, %s98
      %p107 = scmp.eq.s32.totalorder %s38, 3
      %p108 = por %p106, %p107
      %p109 = scmp.ne.s32.totalorder %s98, %s99
      %p110 = scmp.eq.s32.totalorder %s38, 0
      %p111 = por %p109, %p110
      %p112 = scmp.ne.s32.totalorder %s98, %s99
      %p113 = scmp.eq.s32.totalorder %s39, 3
      %p114 = por %p112, %p113
      %p116 = scmp.ne.s32.totalorder %s99, %s115
      %p117 = scmp.eq.s32.totalorder %s39, 0
      %p118 = por %p116, %p117
      %s119 = ssub.s32 %s33, %s40
      %p120 = scmp.eq.s32.totalorder %s119, 0
      %s122 = sadd.s32 %s121, 1
      %s123 = scalar_select %p120, %s121, %s122
      %p126 = pneg %p120
      %p127 = scmp.eq.s32.totalorder %s33, 3
      %p128 = por %p126, %p127
      %p129 = scmp.ne.s32.totalorder %s121, %s124
      %p130 = scmp.eq.s32.totalorder %s33, 0
      %p131 = por %p129, %p130
      %p132 = scmp.ne.s32.totalorder %s121, %s124
      %p133 = scmp.eq.s32.totalorder %s38, 3
      %p134 = por %p132, %p133
      %p135 = scmp.ne.s32.totalorder %s124, %s125
      %p136 = scmp.eq.s32.totalorder %s38, 0
      %p137 = por %p135, %p136
      %p138 = scmp.ne.s32.totalorder %s124, %s125
      %p139 = scmp.eq.s32.totalorder %s39, 3
      %p140 = por %p138, %p139
      %p142 = scmp.ne.s32.totalorder %s125, %s141
      %p143 = scmp.eq.s32.totalorder %s39, 0
      %p144 = por %p142, %p143
      %s145 = ssub.s32 %s33, %s40
      %p146 = scmp.eq.s32.totalorder %s145, 0
      %s148 = sadd.s32 %s147, 1
      %s149 = scalar_select %p146, %s147, %s148
      %p152 = pneg %p146
      %p153 = scmp.eq.s32.totalorder %s33, 3
      %p154 = por %p152, %p153
      %p155 = scmp.ne.s32.totalorder %s147, %s150
      %p156 = scmp.eq.s32.totalorder %s33, 0
      %p157 = por %p155, %p156
      %p158 = scmp.ne.s32.totalorder %s147, %s150
      %p159 = scmp.eq.s32.totalorder %s38, 3
      %p160 = por %p158, %p159
      %p161 = scmp.ne.s32.totalorder %s150, %s151
      %p162 = scmp.eq.s32.totalorder %s38, 0
      %p163 = por %p161, %p162
      %p164 = scmp.ne.s32.totalorder %s150, %s151
      %p165 = scmp.eq.s32.totalorder %s39, 3
      %p166 = por %p164, %p165
      %p168 = scmp.ne.s32.totalorder %s151, %s167
      %p169 = scmp.eq.s32.totalorder %s39, 0
      %p170 = por %p168, %p169
      %s171 = ssub.s32 %s33, %s40
      %p172 = scmp.eq.s32.totalorder %s171, 0
      %s174 = sadd.s32 %s173, 1
      %s175 = scalar_select %p172, %s173, %s174
      %p178 = pneg %p172
      %p179 = scmp.eq.s32.totalorder %s33, 3
      %p180 = por %p178, %p179
      %p181 = scmp.ne.s32.totalorder %s173, %s176
      %p182 = scmp.eq.s32.totalorder %s33, 0
      %p183 = por %p181, %p182
      %p184 = scmp.ne.s32.totalorder %s173, %s176
      %p185 = scmp.eq.s32.totalorder %s38, 3
      %p186 = por %p184, %p185
      %p187 = scmp.ne.s32.totalorder %s176, %s177
      %p188 = scmp.eq.s32.totalorder %s38, 0
      %p189 = por %p187, %p188
      %p190 = scmp.ne.s32.totalorder %s176, %s177
      %p191 = scmp.eq.s32.totalorder %s39, 3
      %p192 = por %p190, %p191
      %p194 = scmp.ne.s32.totalorder %s177, %s193
      %p195 = scmp.eq.s32.totalorder %s39, 0
      %p196 = por %p194, %p195
      %s197 = ssub.s32 %s33, %s40
      %p198 = scmp.eq.s32.totalorder %s197, 0
      %s200 = sadd.s32 %s199, 1
      %s201 = scalar_select %p198, %s199, %s200
      %p204 = pneg %p198
      %p205 = scmp.eq.s32.totalorder %s33, 3
      %p206 = por %p204, %p205
      %p207 = scmp.ne.s32.totalorder %s199, %s202
      %p208 = scmp.eq.s32.totalorder %s33, 0
      %p209 = por %p207, %p208
      %p210 = scmp.ne.s32.totalorder %s199, %s202
      %p211 = scmp.eq.s32.totalorder %s38, 3
      %p212 = por %p210, %p211
      %p213 = scmp.ne.s32.totalorder %s202, %s203
      %p214 = scmp.eq.s32.totalorder %s38, 0
      %p215 = por %p213, %p214
      %p216 = scmp.ne.s32.totalorder %s202, %s203
      %p217 = scmp.eq.s32.totalorder %s39, 3
      %p218 = por %p216, %p217
      %p220 = scmp.ne.s32.totalorder %s203, %s219
      %p221 = scmp.eq.s32.totalorder %s39, 0
      %p222 = por %p220, %p221
      %s223 = ssub.s32 %s33, %s40
      %p224 = scmp.eq.s32.totalorder %s223, 0
      %s226 = sadd.s32 %s225, 1
      %s227 = scalar_select %p224, %s225, %s226
      %p230 = pneg %p224
      %p231 = scmp.eq.s32.totalorder %s33, 3
      %p232 = por %p230, %p231
      %p233 = scmp.ne.s32.totalorder %s225, %s228
      %p234 = scmp.eq.s32.totalorder %s33, 0
      %p235 = por %p233, %p234
      %p236 = scmp.ne.s32.totalorder %s225, %s228
      %p237 = scmp.eq.s32.totalorder %s38, 3
      %p238 = por %p236, %p237
      %p239 = scmp.ne.s32.totalorder %s228, %s229
      %p240 = scmp.eq.s32.totalorder %s38, 0
      %p241 = por %p239, %p240
      %p242 = scmp.ne.s32.totalorder %s228, %s229
      %p243 = scmp.eq.s32.totalorder %s39, 3
      %p244 = por %p242, %p243
      %p246 = scmp.ne.s32.totalorder %s229, %s245
      %p247 = scmp.eq.s32.totalorder %s39, 0
      %p248 = por %p246, %p247
      %s249 = ssub.s32 %s33, %s40
      %p250 = scmp.eq.s32.totalorder %s249, 0
      %s252 = sadd.s32 %s251, 1
      %s253 = scalar_select %p250, %s251, %s252
      %p256 = pneg %p250
      %p257 = scmp.eq.s32.totalorder %s33, 3
      %p258 = por %p256, %p257
      %p259 = scmp.ne.s32.totalorder %s251, %s254
      %p260 = scmp.eq.s32.totalorder %s33, 0
      %p261 = por %p259, %p260
      %p262 = scmp.ne.s32.totalorder %s251, %s254
      %p263 = scmp.eq.s32.totalorder %s38, 3
      %p264 = por %p262, %p263
      %p265 = scmp.ne.s32.totalorder %s254, %s255
      %p266 = scmp.eq.s32.totalorder %s38, 0
      %p267 = por %p265, %p266
      %p268 = scmp.ne.s32.totalorder %s254, %s255
      %p269 = scmp.eq.s32.totalorder %s39, 3
      %p270 = por %p268, %p269
      %p272 = scmp.ne.s32.totalorder %s255, %s271
      %p273 = scmp.eq.s32.totalorder %s39, 0
      %p274 = por %p272, %p273
      %s275 = ssub.s32 %s33, %s40
      %p276 = scmp.eq.s32.totalorder %s275, 0
      %s278 = sadd.s32 %s277, 1
      %s279 = scalar_select %p276, %s277, %s278
      %p282 = pneg %p276
      %p283 = scmp.eq.s32.totalorder %s33, 3
      %p284 = por %p282, %p283
      %p285 = scmp.ne.s32.totalorder %s277, %s280
      %p286 = scmp.eq.s32.totalorder %s33, 0
      %p287 = por %p285, %p286
      %p288 = scmp.ne.s32.totalorder %s277, %s280
      %p289 = scmp.eq.s32.totalorder %s38, 3
      %p290 = por %p288, %p289
      %p291 = scmp.ne.s32.totalorder %s280, %s281
      %p292 = scmp.eq.s32.totalorder %s38, 0
      %p293 = por %p291, %p292
      %p294 = scmp.ne.s32.totalorder %s280, %s281
      %p295 = scmp.eq.s32.totalorder %s39, 3
      %p296 = por %p294, %p295
      %p298 = scmp.ne.s32.totalorder %s281, %s297
      %p299 = scmp.eq.s32.totalorder %s39, 0
      %p300 = por %p298, %p299
      %p301 = scmp.le.s32.totalorder 1, %s33
      %p302 = scmp.lt.s32.totalorder %s33, 5
      %p303 = pnand %p301, %p302
      %p304 = pneg %p303
      // Predicated region
      $region9: #{tpu_custom_call.1} parent=5 // pred_check
        _
      $region10: #{tpu_custom_call.1} parent=5 // pred_check_branch
        %306 = sbr.rel (%p303) target = $region12
      $region11: #{tpu_custom_call.1} parent=5 // pred_region
        %s307 = ssub.s32 %s33, 1
      $region12: #{tpu_custom_call.1} parent=5 // pred_fallthru
        _
      %p308 = scmp.lt.s32.totalorder %s33, 4
      // Predicated region
      $region13: #{tpu_custom_call.1} parent=5 // pred_check
        %p309 = pneg %p308
      $region14: #{tpu_custom_call.1} parent=5 // pred_check_branch
        %311 = sbr.rel (%p309) target = $region16
      $region15: #{tpu_custom_call.1} parent=5 // pred_region
        // Predicated region
        $region17: #{tpu_custom_call.1} parent=15 // pred_check
          %p312 = pneg %p53
        $region18: #{tpu_custom_call.1} parent=15 // pred_check_branch
          %314 = sbr.rel (%p312) target = $region20
        $region19: #{tpu_custom_call.1} parent=15 // pred_region
          %s315 = sand.u32 %s43, 1
          %s316 = scalar_lea.sflag [#allocation3], %s315
          %s317 = sand.u32 %s43, 1
          %s318 = smul.addr %s317, 8
          %s319 = scalar_lea.vmem [#allocation2], %s318
          %321 = vsyncadd %s316, 0
          %s322 = smul.addr %s33, 2
          %s323 = smul.addr %s322, 4
          %s324 = scalar_lea.hbm %s0, %s323
          %s325 = sshll.u32 %s324, 4
          %s326 = int_to_ptr.hbm [resolvable:$true] %s325
          %s327 = sshll.u32 %s319, 4
          %s328 = int_to_ptr.vmem [resolvable:$true] %s327
          %333 = dma.hbm_to_vmem [thread:$0]  %s326, 128, %s328, %s316, 64, 64, 4
        $region20: #{tpu_custom_call.1} parent=15 // pred_fallthru
          _
        // Predicated region
        $region21: #{tpu_custom_call.1} parent=15 // pred_check
          %p334 = pneg %p79
        $region22: #{tpu_custom_call.1} parent=15 // pred_check_branch
          %336 = sbr.rel (%p334) target = $region24
        $region23: #{tpu_custom_call.1} parent=15 // pred_region
          %s337 = sand.u32 %s33, 1
          %s338 = scalar_lea.sflag [#allocation6], %s337
          %s339 = sand.u32 %s69, 1
          %s340 = smul.addr %s339, 8
          %s341 = scalar_lea.vmem [#allocation5], %s340
          %343 = vsyncadd %s338, 0
          %s344 = smul.addr %s33, 2
          %s345 = smul.addr %s344, 4
          %s346 = scalar_lea.hbm %s1, %s345
          %s347 = sshll.u32 %s346, 4
          %s348 = int_to_ptr.hbm [resolvable:$true] %s347
          %s349 = sshll.u32 %s341, 4
          %s350 = int_to_ptr.vmem [resolvable:$true] %s349
          %355 = dma.hbm_to_vmem [thread:$0]  %s348, 128, %s350, %s338, 64, 64, 4
        $region24: #{tpu_custom_call.1} parent=15 // pred_fallthru
          _
        // Predicated region
        $region25: #{tpu_custom_call.1} parent=15 // pred_check
          %p356 = pneg %p105
        $region26: #{tpu_custom_call.1} parent=15 // pred_check_branch
          %358 = sbr.rel (%p356) target = $region28
        $region27: #{tpu_custom_call.1} parent=15 // pred_region
          %s359 = sand.u32 %s33, 1
          %s360 = scalar_lea.sflag [#allocation6], %s359
          %s361 = sand.u32 %s95, 1
          %s362 = smul.addr %s361, 16
          %s363 = scalar_lea.vmem [#allocation7], %s362
          %365 = vsyncadd %s360, 0
          %s366 = smul.addr %s33, 4
          %s367 = smul.addr %s366, 4
          %s368 = scalar_lea.hbm %s2, %s367
          %s369 = sshll.u32 %s368, 4
          %s370 = int_to_ptr.hbm [resolvable:$true] %s369
          %s371 = sshll.u32 %s363, 4
          %s372 = int_to_ptr.vmem [resolvable:$true] %s371
          %377 = dma.hbm_to_vmem [thread:$0]  %s370, 256, %s372, %s360, 64, 64, 4
        $region28: #{tpu_custom_call.1} parent=15 // pred_fallthru
          _
        // Predicated region
        $region29: #{tpu_custom_call.1} parent=15 // pred_check
          %p378 = pneg %p131
        $region30: #{tpu_custom_call.1} parent=15 // pred_check_branch
          %380 = sbr.rel (%p378) target = $region32
        $region31: #{tpu_custom_call.1} parent=15 // pred_region
          %s381 = sand.u32 %s33, 1
          %s382 = scalar_lea.sflag [#allocation9], %s381
          %s383 = sand.u32 %s121, 1
          %s384 = scalar_lea.vmem [#allocation8], %s383
          %386 = vsyncadd %s382, 0
          %s387 = scalar_lea.hbm %s3, %s33
          %s389 = sshll.u32 %s387, 4
          %s390 = int_to_ptr.hbm [resolvable:$true] %s389
          %s391 = sshll.u32 %s384, 4
          %s392 = int_to_ptr.vmem [resolvable:$true] %s391
          %394 = dma.hbm_to_vmem [thread:$0]  %s390, 16, %s392, %s382
        $region32: #{tpu_custom_call.1} parent=15 // pred_fallthru
          _
        // Predicated region
        $region33: #{tpu_custom_call.1} parent=15 // pred_check
          %p395 = pneg %p157
        $region34: #{tpu_custom_call.1} parent=15 // pred_check_branch
          %397 = sbr.rel (%p395) target = $region36
        $region35: #{tpu_custom_call.1} parent=15 // pred_region
          %s398 = sand.u32 %s33, 1
          %s399 = scalar_lea.sflag [#allocation9], %s398
          %s400 = sand.u32 %s147, 1
          %s401 = smul.addr %s400, 4
          %s402 = scalar_lea.vmem [#allocation10], %s401
          %404 = vsyncadd %s399, 0
          %s405 = smul.addr %s33, 4
          %s406 = scalar_lea.hbm %s4, %s405
          %s408 = sshll.u32 %s406, 4
          %s409 = int_to_ptr.hbm [resolvable:$true] %s408
          %s410 = sshll.u32 %s402, 4
          %s411 = int_to_ptr.vmem [resolvable:$true] %s410
          %413 = dma.hbm_to_vmem [thread:$0]  %s409, 64, %s411, %s399
        $region36: #{tpu_custom_call.1} parent=15 // pred_fallthru
          _
        // Predicated region
        $region37: #{tpu_custom_call.1} parent=15 // pred_check
          %p414 = pneg %p183
        $region38: #{tpu_custom_call.1} parent=15 // pred_check_branch
          %416 = sbr.rel (%p414) target = $region40
        $region39: #{tpu_custom_call.1} parent=15 // pred_region
          %p417 = scmp.lt.s32.totalorder %s33, 3
          %s418 = scalar_select %p417, %s33, 3
          %s419 = scalar_lea.vmem %s5, %s418
        $region40: #{tpu_custom_call.1} parent=15 // pred_fallthru
          _
        // Predicated region
        $region41: #{tpu_custom_call.1} parent=15 // pred_check
          %p420 = pneg %p209
        $region42: #{tpu_custom_call.1} parent=15 // pred_check_branch
          %422 = sbr.rel (%p420) target = $region44
        $region43: #{tpu_custom_call.1} parent=15 // pred_region
          %s423 = sand.u32 %s33, 1
          %s424 = scalar_lea.sflag [#allocation12], %s423
          %s425 = sand.u32 %s199, 1
          %s426 = scalar_lea.vmem [#allocation11], %s425
          %428 = vsyncadd %s424, 0
          %s429 = scalar_lea.hbm %s6, %s33
          %s431 = sshll.u32 %s429, 4
          %s432 = int_to_ptr.hbm [resolvable:$true] %s431
          %s433 = sshll.u32 %s426, 4
          %s434 = int_to_ptr.vmem [resolvable:$true] %s433
          %436 = dma.hbm_to_vmem [thread:$0]  %s432, 16, %s434, %s424
        $region44: #{tpu_custom_call.1} parent=15 // pred_fallthru
          _
        // Predicated region
        $region45: #{tpu_custom_call.1} parent=15 // pred_check
          %p437 = pneg %p235
        $region46: #{tpu_custom_call.1} parent=15 // pred_check_branch
          %439 = sbr.rel (%p437) target = $region48
        $region47: #{tpu_custom_call.1} parent=15 // pred_region
          %s440 = sand.u32 %s33, 1
          %s441 = scalar_lea.sflag [#allocation12], %s440
          %s442 = sand.u32 %s225, 1
          %s443 = scalar_lea.vmem [#allocation13], %s442
          %445 = vsyncadd %s441, 0
          %s446 = scalar_lea.hbm %s7, %s33
          %s448 = sshll.u32 %s446, 4
          %s449 = int_to_ptr.hbm [resolvable:$true] %s448
          %s450 = sshll.u32 %s443, 4
          %s451 = int_to_ptr.vmem [resolvable:$true] %s450
          %453 = dma.hbm_to_vmem [thread:$0]  %s449, 16, %s451, %s441
        $region48: #{tpu_custom_call.1} parent=15 // pred_fallthru
          _
        // Predicated region
        $region49: #{tpu_custom_call.1} parent=15 // pred_check
          %p454 = pneg %p261
        $region50: #{tpu_custom_call.1} parent=15 // pred_check_branch
          %456 = sbr.rel (%p454) target = $region52
        $region51: #{tpu_custom_call.1} parent=15 // pred_region
          %s457 = sand.u32 %s251, 1
          %s458 = scalar_lea.sflag [#allocation15], %s457
          %s459 = sand.u32 %s251, 1
          %s460 = smul.addr %s459, 16
          %s461 = scalar_lea.vmem [#allocation14], %s460
          %463 = vsyncadd %s458, 0
          %s464 = smul.addr %s33, 2
          %s465 = smul.addr %s464, 8
          %s466 = scalar_lea.hbm %s8, %s465
          %s467 = sshll.u32 %s466, 4
          %s468 = int_to_ptr.hbm [resolvable:$true] %s467
          %s469 = sshll.u32 %s461, 4
          %s470 = int_to_ptr.vmem [resolvable:$true] %s469
          %475 = dma.hbm_to_vmem [thread:$0]  %s468, 256, %s470, %s458, 128, 128, 8
        $region52: #{tpu_custom_call.1} parent=15 // pred_fallthru
          _
      $region16: #{tpu_custom_call.1} parent=5 // pred_fallthru
        _
      %p476 = scmp.le.s32.totalorder 1, %s33
      %p477 = scmp.lt.s32.totalorder %s33, 5
      %p478 = pnand %p476, %p477
      %p479 = pneg %p478
      // Predicated region
      $region53: #{tpu_custom_call.1} parent=5 // pred_check
        _
      $region54: #{tpu_custom_call.1} parent=5 // pred_check_branch
        %481 = sbr.rel (%p478) target = $region56
      $region55: #{tpu_custom_call.1} parent=5 // pred_region
        %s482 = ssub.s32 %s33, 1
        %s483 = sand.u32 %s46, 1
        %s484 = scalar_lea.sflag [#allocation3], %s483
        %s485 = sand.u32 %s46, 1
        %s486 = smul.addr %s485, 8
        %s487 = scalar_lea.vmem [#allocation2], %s486
        // Predicated region
        $region57: #{tpu_custom_call.1} parent=55 // pred_check
          %p488 = pneg %p59
        $region58: #{tpu_custom_call.1} parent=55 // pred_check_branch
          %490 = sbr.rel (%p488) target = $region60
        $region59: #{tpu_custom_call.1} parent=55 // pred_region
          %492 = dma.done %s484, 128
        $region60: #{tpu_custom_call.1} parent=55 // pred_fallthru
          _
        %s493 = sand.u32 %s38, 1
        %s494 = scalar_lea.sflag [#allocation6], %s493
        %s495 = sand.u32 %s72, 1
        %s496 = smul.addr %s495, 8
        %s497 = scalar_lea.vmem [#allocation5], %s496
        // Predicated region
        $region61: #{tpu_custom_call.1} parent=55 // pred_check
          %p498 = pneg %p85
        $region62: #{tpu_custom_call.1} parent=55 // pred_check_branch
          %500 = sbr.rel (%p498) target = $region64
        $region63: #{tpu_custom_call.1} parent=55 // pred_region
          %502 = dma.done %s494, 128
        $region64: #{tpu_custom_call.1} parent=55 // pred_fallthru
          _
        %s503 = sand.u32 %s38, 1
        %s504 = scalar_lea.sflag [#allocation6], %s503
        %s505 = sand.u32 %s98, 1
        %s506 = smul.addr %s505, 16
        %s507 = scalar_lea.vmem [#allocation7], %s506
        // Predicated region
        $region65: #{tpu_custom_call.1} parent=55 // pred_check
          %p508 = pneg %p111
        $region66: #{tpu_custom_call.1} parent=55 // pred_check_branch
          %510 = sbr.rel (%p508) target = $region68
        $region67: #{tpu_custom_call.1} parent=55 // pred_region
          %512 = dma.done %s504, 256
        $region68: #{tpu_custom_call.1} parent=55 // pred_fallthru
          _
        %s513 = sand.u32 %s38, 1
        %s514 = scalar_lea.sflag [#allocation9], %s513
        %s515 = sand.u32 %s124, 1
        %s516 = scalar_lea.vmem [#allocation8], %s515
        // Predicated region
        $region69: #{tpu_custom_call.1} parent=55 // pred_check
          %p517 = pneg %p137
        $region70: #{tpu_custom_call.1} parent=55 // pred_check_branch
          %519 = sbr.rel (%p517) target = $region72
        $region71: #{tpu_custom_call.1} parent=55 // pred_region
          %521 = dma.done %s514, 16
        $region72: #{tpu_custom_call.1} parent=55 // pred_fallthru
          _
        %s522 = sand.u32 %s38, 1
        %s523 = scalar_lea.sflag [#allocation9], %s522
        %s524 = sand.u32 %s150, 1
        %s525 = smul.addr %s524, 4
        %s526 = scalar_lea.vmem [#allocation10], %s525
        // Predicated region
        $region73: #{tpu_custom_call.1} parent=55 // pred_check
          %p527 = pneg %p163
        $region74: #{tpu_custom_call.1} parent=55 // pred_check_branch
          %529 = sbr.rel (%p527) target = $region76
        $region75: #{tpu_custom_call.1} parent=55 // pred_region
          %531 = dma.done %s523, 64
        $region76: #{tpu_custom_call.1} parent=55 // pred_fallthru
          _
        %s532 = sand.u32 %s38, 1
        %s533 = scalar_lea.sflag [#allocation12], %s532
        %s534 = sand.u32 %s202, 1
        %s535 = scalar_lea.vmem [#allocation11], %s534
        // Predicated region
        $region77: #{tpu_custom_call.1} parent=55 // pred_check
          %p536 = pneg %p215
        $region78: #{tpu_custom_call.1} parent=55 // pred_check_branch
          %538 = sbr.rel (%p536) target = $region80
        $region79: #{tpu_custom_call.1} parent=55 // pred_region
          %540 = dma.done %s533, 16
        $region80: #{tpu_custom_call.1} parent=55 // pred_fallthru
          _
        %s541 = sand.u32 %s38, 1
        %s542 = scalar_lea.sflag [#allocation12], %s541
        %s543 = sand.u32 %s228, 1
        %s544 = scalar_lea.vmem [#allocation13], %s543
        // Predicated region
        $region81: #{tpu_custom_call.1} parent=55 // pred_check
          %p545 = pneg %p241
        $region82: #{tpu_custom_call.1} parent=55 // pred_check_branch
          %547 = sbr.rel (%p545) target = $region84
        $region83: #{tpu_custom_call.1} parent=55 // pred_region
          %549 = dma.done %s542, 16
        $region84: #{tpu_custom_call.1} parent=55 // pred_fallthru
          _
        %s550 = sand.u32 %s254, 1
        %s551 = scalar_lea.sflag [#allocation15], %s550
        %s552 = sand.u32 %s254, 1
        %s553 = smul.addr %s552, 16
        %s554 = scalar_lea.vmem [#allocation14], %s553
        // Predicated region
        $region85: #{tpu_custom_call.1} parent=55 // pred_check
          %p555 = pneg %p267
        $region86: #{tpu_custom_call.1} parent=55 // pred_check_branch
          %557 = sbr.rel (%p555) target = $region88
        $region87: #{tpu_custom_call.1} parent=55 // pred_region
          %559 = dma.done %s551, 256
        $region88: #{tpu_custom_call.1} parent=55 // pred_fallthru
          _
        %s560 = sand.u32 %s46, 1
        %s561 = scalar_lea.sflag [#allocation3], %s560
        %s562 = sand.u32 %s46, 1
        %s563 = smul.addr %s562, 8
        %s564 = scalar_lea.vmem [#allocation2], %s563
        %p565 = pneg %p59
        %p566 = pneg %p56
        %s567 = sand.u32 %s38, 1
        %s568 = scalar_lea.sflag [#allocation6], %s567
        %s569 = sand.u32 %s72, 1
        %s570 = smul.addr %s569, 8
        %s571 = scalar_lea.vmem [#allocation5], %s570
        %p572 = pneg %p85
        %p573 = pneg %p82
        %s574 = sand.u32 %s38, 1
        %s575 = scalar_lea.sflag [#allocation6], %s574
        %s576 = sand.u32 %s98, 1
        %s577 = smul.addr %s576, 16
        %s578 = scalar_lea.vmem [#allocation7], %s577
        %p579 = pneg %p111
        %p580 = pneg %p108
        %s581 = sand.u32 %s38, 1
        %s582 = scalar_lea.sflag [#allocation9], %s581
        %s583 = sand.u32 %s124, 1
        %s584 = scalar_lea.vmem [#allocation8], %s583
        %p585 = pneg %p137
        %p586 = pneg %p134
        %s587 = sand.u32 %s38, 1
        %s588 = scalar_lea.sflag [#allocation9], %s587
        %s589 = sand.u32 %s150, 1
        %s590 = smul.addr %s589, 4
        %s591 = scalar_lea.vmem [#allocation10], %s590
        %p592 = pneg %p163
        %p593 = pneg %p160
        %p594 = scmp.lt.s32.totalorder %s38, 3
        %s595 = scalar_select %p594, %s38, 3
        %s596 = scalar_lea.vmem %s5, %s595
        %p597 = pneg %p189
        %p598 = pneg %p186
        %s599 = sand.u32 %s38, 1
        %s600 = scalar_lea.sflag [#allocation12], %s599
        %s601 = sand.u32 %s202, 1
        %s602 = scalar_lea.vmem [#allocation11], %s601
        %p603 = pneg %p215
        %p604 = pneg %p212
        %s605 = sand.u32 %s38, 1
        %s606 = scalar_lea.sflag [#allocation12], %s605
        %s607 = sand.u32 %s228, 1
        %s608 = scalar_lea.vmem [#allocation13], %s607
        %p609 = pneg %p241
        %p610 = pneg %p238
        %s611 = sand.u32 %s254, 1
        %s612 = scalar_lea.sflag [#allocation15], %s611
        %s613 = sand.u32 %s254, 1
        %s614 = smul.addr %s613, 16
        %s615 = scalar_lea.vmem [#allocation14], %s614
        %p616 = pneg %p267
        %p617 = pneg %p264
        %p618 = pneg %p293
        %p619 = pneg %p290
        %s620 = sand.u32 %s280, 1
        %s621 = scalar_lea.sflag [#allocation4], %s620
        %s622 = sand.u32 %s280, 1
        %s623 = smul.addr %s622, 16
        %s624 = scalar_lea.vmem [#allocation16], %s623
        %p625 = scmp.lt.s32.totalorder %s38, 3
        %s626 = scalar_select %p625, %s38, 3
        %s627 = scalar_lea.vmem %s5, %s626
        %v629 = vld [vmem:[%s487] sm:$0xf]
        %v630 = vld [vmem:[%s487 + $0x4] sm:$0xf]
        %v631 = vld [vmem:[%s497] sm:$0xf]
        %v632 = vld [vmem:[%s497 + $0x4] sm:$0xf]
        %v635 = vunpack.c.l.b16 %v629
        %v636 = vunpack.c.l.b16 %v630
        %v637 = vpack.c.b16 %v636, %v635
        %v640 = vunpack.c.l.b16 %v631
        %v641 = vunpack.c.l.b16 %v632
        %v642 = vpack.c.b16 %v641, %v640
        %v643 = vld [vmem:[%s507] sm:$0xf]
        %v644 = vld [vmem:[%s507 + $0x4] sm:$0xf]
        %v645 = vld [vmem:[%s507 + $0x8] sm:$0xf]
        %v646 = vld [vmem:[%s507 + $0xc] sm:$0xf]
        %v647 = vld [vmem:[%s516] sm:$0x1]
        %v649 = vperm.slane %v647, 0
        %v655 = vunpack.c.l.b16 %v643
        %v656 = vunpack.c.l.b16 %v644
        %v657 = vunpack.c.l.b16 %v645
        %v658 = vunpack.c.l.b16 %v646
        %v659 = vpack.c.b16 %v656, %v655
        %v660 = vpack.c.b16 %v658, %v657
        %vm663 = vcmask 261120
        %v665 = vsel %vm663, %v637, 0
        %v668 = vsel %vm663, %v642, 0
        %670 = vmatpush.bf16.msra.mxu0 0
        %671 = vmatpush.bf16.msra.mxu0 0
        %672 = vmatpush.bf16.msra.mxu0 0
        %673 = vmatpush.bf16.msra.mxu0 0
        %674 = vmatpush.bf16.msra.mxu0 0
        %675 = vmatpush.bf16.msra.mxu0 0
        %676 = vmatpush.bf16.msra.mxu0 %v660
        %677 = vmatpush.bf16.msra.mxu0 %v659
        %678 = vmatmul.bf16.gmra.mxu0 %v665
        %v679 = vpop.f32.mrf.mxu0
        %v680 = vadd.f32 %v649, %v679
        %v681 = vpop.f32.mrf.mxu0
        %v682 = vadd.f32 %v649, %v681
        %683 = vmatmul.bf16.gmra.mxu0 %v668
        %v684 = vpop.f32.mrf.mxu0
        %v685 = vadd.f32 %v649, %v684
        %v686 = vpop.f32.mrf.mxu0
        %v687 = vadd.f32 %v649, %v686
        %688 = vdwg.mxu0
        %v689 = vld [vmem:[%s526] sm:$0xf]
        %v690 = vld [vmem:[%s535] sm:$0x1]
        %v692 = vperm.slane %v690, 0
        %v694 = vmul.f32 %v689, %v692
        %v695 = vld [vmem:[%s627] sm:$0x1]
        %v696 = vld [vmem:[%s544] sm:$0x1]
        %v697 = vmul.f32 %v695, %v696
        %vm698 = vcmask 523264
        %v700 = vsel %vm698, %v694, 0
        %v703 = vsel %vm698, %v680, 0
        %v706 = vsel %vm698, %v682, 0
        %708 = vmatpush.xpose.msra.mxu0 0.0
        %709 = vmatpush.xpose.msra.mxu0 0.0
        %710 = vmatpush.xpose.msra.mxu0 0.0
        %711 = vmatpush.xpose.msra.mxu0 0.0
        %712 = vmatpush.xpose.msra.mxu0 0.0
        %713 = vmatpush.xpose.msra.mxu0 0.0
        %714 = vmatpush.xpose.msra.mxu0 0.0
        %715 = vmatpush.xpose.msra.mxu0 0.0
        %716 = vmatpush.xpose.msra.mxu0 0.0
        %717 = vmatpush.xpose.msra.mxu0 0.0
        %718 = vmatpush.xpose.msra.mxu0 0.0
        %719 = vmatpush.xpose.msra.mxu0 0.0
        %720 = vmatpush.xpose.msra.mxu0 0.0
        %721 = vmatpush.xpose.msra.mxu0 0.0
        %722 = vmatpush.xpose.msra.mxu0 %v706
        %723 = vmatpush.xpose.msra.mxu0 %v703
        %724 = vmatmul.f32.gmra.mxu0 %v700
        %v725 = vpop.f32.mrf.mxu0
        %v726 = vadd.f32 0.0, %v725
        %727 = vdwg.mxu0
        %v729 = vperm.slane %v697, 0
        %v731 = vmul.f32 %v685, %v729
        %v732 = vmul.f32 %v687, %v729
        %735 = vrot.lane.b32.xlu0 %v731, 112
        %v736 = vpop.permute.xlu0 %735
        %737 = vrot.lane.b32.xlu0 %v732, 112
        %v738 = vpop.permute.xlu0 %737
        %741 = vrot.lane.b32.xlu0 %v731, 96
        %v742 = vpop.permute.xlu0 %741
        %743 = vrot.lane.b32.xlu0 %v732, 96
        %v744 = vpop.permute.xlu0 %743
        %747 = vrot.lane.b32.xlu0 %v731, 80
        %v748 = vpop.permute.xlu0 %747
        %749 = vrot.lane.b32.xlu0 %v732, 80
        %v750 = vpop.permute.xlu0 %749
        %vm753 = vcmask 130048
        %v754 = vsel %vm753, %v731, 0.0
        %755 = vadd.xlane.f32.xlu0 %v754
        %v756 = vpop.xlane.xlu0 %755
        %v757 = vsel %vm753, %v732, 0.0
        %758 = vadd.xlane.f32.xlu0 %v757
        %v759 = vpop.xlane.xlu0 %758
        %v760 = vsel %vm753, %v736, 0.0
        %761 = vadd.xlane.f32.xlu0 %v760
        %v762 = vpop.xlane.xlu0 %761
        %v763 = vsel %vm753, %v738, 0.0
        %764 = vadd.xlane.f32.xlu0 %v763
        %v765 = vpop.xlane.xlu0 %764
        %v766 = vsel %vm753, %v742, 0.0
        %767 = vadd.xlane.f32.xlu0 %v766
        %v768 = vpop.xlane.xlu0 %767
        %v769 = vsel %vm753, %v744, 0.0
        %770 = vadd.xlane.f32.xlu0 %v769
        %v771 = vpop.xlane.xlu0 %770
        %v772 = vsel %vm753, %v748, 0.0
        %773 = vadd.xlane.f32.xlu0 %v772
        %v774 = vpop.xlane.xlu0 %773
        %v775 = vsel %vm753, %v750, 0.0
        %776 = vadd.xlane.f32.xlu0 %v775
        %v777 = vpop.xlane.xlu0 %776
        %v779 = vrot.slane %v726, 1
        %v781 = vrot.slane %v726, 2
        %v783 = vrot.slane %v726, 3
        %v785 = vld [vmem:[%s554] sm:$0xff]
        %v786 = vld [vmem:[%s554 + $0x8] sm:$0xff]
        %vm787 = vcmp.gt.f32.partialorder %v785, 0.0
        %vm788 = vcmp.gt.f32.partialorder %v786, 0.0
        %v789 = vsel %vm787, 0.0, -1e+09
        %v790 = vsel %vm788, 0.0, -1e+09
        %v791 = vperm.slane %v726, 0
        %v792 = vperm.slane %v779, 0
        %v793 = vperm.slane %v781, 0
        %v794 = vperm.slane %v783, 0
        %v795 = vadd.f32 %v756, %v791
        %v796 = vadd.f32 %v759, %v791
        %v797 = vadd.f32 %v762, %v792
        %v798 = vadd.f32 %v765, %v792
        %v799 = vadd.f32 %v768, %v793
        %v800 = vadd.f32 %v771, %v793
        %v801 = vadd.f32 %v774, %v794
        %v802 = vadd.f32 %v777, %v794
        %vm803 = vcmp.gt.f32.partialorder %v795, 0.0
        %vm804 = vcmp.gt.f32.partialorder %v796, 0.0
        %vm805 = vcmp.gt.f32.partialorder %v797, 0.0
        %vm806 = vcmp.gt.f32.partialorder %v798, 0.0
        %vm807 = vcmp.gt.f32.partialorder %v799, 0.0
        %vm808 = vcmp.gt.f32.partialorder %v800, 0.0
        %vm809 = vcmp.gt.f32.partialorder %v801, 0.0
        %vm810 = vcmp.gt.f32.partialorder %v802, 0.0
        %v811 = vmul.f32 %v795, 0.2
        %v812 = vmul.f32 %v796, 0.2
        %v813 = vmul.f32 %v797, 0.2
        %v814 = vmul.f32 %v798, 0.2
        %v815 = vmul.f32 %v799, 0.2
        %v816 = vmul.f32 %v800, 0.2
        %v817 = vmul.f32 %v801, 0.2
        %v818 = vmul.f32 %v802, 0.2
        %v819 = vsel %vm803, %v795, %v811
        %v820 = vsel %vm804, %v796, %v812
        %v821 = vsel %vm805, %v797, %v813
        %v822 = vsel %vm806, %v798, %v814
        %v823 = vsel %vm807, %v799, %v815
        %v824 = vsel %vm808, %v800, %v816
        %v825 = vsel %vm809, %v801, %v817
        %v826 = vsel %vm810, %v802, %v818
        %v827 = vadd.f32 %v819, %v789
        %v828 = vadd.f32 %v820, %v790
        %v829 = vadd.f32 %v821, %v789
        %v830 = vadd.f32 %v822, %v790
        %v831 = vadd.f32 %v823, %v789
        %v832 = vadd.f32 %v824, %v790
        %v833 = vadd.f32 %v825, %v789
        %v834 = vadd.f32 %v826, %v790
        %v835 = vsel %vm753, %v827, -inf
        %836 = vmax.xlane.f32.xlu0 %v835
        %v837 = vpop.xlane.xlu0 %836
        %v838 = vsel %vm753, %v828, -inf
        %839 = vmax.xlane.f32.xlu0 %v838
        %v840 = vpop.xlane.xlu0 %839
        %v841 = vsel %vm753, %v829, -inf
        %842 = vmax.xlane.f32.xlu0 %v841
        %v843 = vpop.xlane.xlu0 %842
        %v844 = vsel %vm753, %v830, -inf
        %845 = vmax.xlane.f32.xlu0 %v844
        %v846 = vpop.xlane.xlu0 %845
        %v847 = vsel %vm753, %v831, -inf
        %848 = vmax.xlane.f32.xlu0 %v847
        %v849 = vpop.xlane.xlu0 %848
        %v850 = vsel %vm753, %v832, -inf
        %851 = vmax.xlane.f32.xlu0 %v850
        %v852 = vpop.xlane.xlu0 %851
        %v853 = vsel %vm753, %v833, -inf
        %854 = vmax.xlane.f32.xlu0 %v853
        %v855 = vpop.xlane.xlu0 %854
        %v856 = vsel %vm753, %v834, -inf
        %857 = vmax.xlane.f32.xlu0 %v856
        %v858 = vpop.xlane.xlu0 %857
        %v859 = vsub.f32 %v827, %v837
        %v860 = vsub.f32 %v828, %v840
        %v861 = vsub.f32 %v829, %v843
        %v862 = vsub.f32 %v830, %v846
        %v863 = vsub.f32 %v831, %v849
        %v864 = vsub.f32 %v832, %v852
        %v865 = vsub.f32 %v833, %v855
        %v866 = vsub.f32 %v834, %v858
        %v867 = vmul.f32 %v859, 1.442695
        %v868 = vpow.pop %v867
        %v869 = vmul.f32 %v860, 1.442695
        %v870 = vpow.pop %v869
        %v871 = vmul.f32 %v861, 1.442695
        %v872 = vpow.pop %v871
        %v873 = vmul.f32 %v862, 1.442695
        %v874 = vpow.pop %v873
        %v875 = vmul.f32 %v863, 1.442695
        %v876 = vpow.pop %v875
        %v877 = vmul.f32 %v864, 1.442695
        %v878 = vpow.pop %v877
        %v879 = vmul.f32 %v865, 1.442695
        %v880 = vpow.pop %v879
        %v881 = vmul.f32 %v866, 1.442695
        %v882 = vpow.pop %v881
        %v883 = vsel %vm787, 1, 0
        %v884 = vsel %vm788, 1, 0
        %v885 = vcvt.s32.f32 %v883
        %v886 = vcvt.s32.f32 %v884
        %v887 = vmul.f32 %v868, %v885
        %v888 = vmul.f32 %v870, %v886
        %v889 = vmul.f32 %v872, %v885
        %v890 = vmul.f32 %v874, %v886
        %v891 = vmul.f32 %v876, %v885
        %v892 = vmul.f32 %v878, %v886
        %v893 = vmul.f32 %v880, %v885
        %v894 = vmul.f32 %v882, %v886
        %v895 = vsel %vm753, %v887, 0.0
        %896 = vadd.xlane.f32.xlu0 %v895
        %v897 = vpop.xlane.xlu0 %896
        %v898 = vsel %vm753, %v888, 0.0
        %899 = vadd.xlane.f32.xlu0 %v898
        %v900 = vpop.xlane.xlu0 %899
        %v901 = vsel %vm753, %v889, 0.0
        %902 = vadd.xlane.f32.xlu0 %v901
        %v903 = vpop.xlane.xlu0 %902
        %v904 = vsel %vm753, %v890, 0.0
        %905 = vadd.xlane.f32.xlu0 %v904
        %v906 = vpop.xlane.xlu0 %905
        %v907 = vsel %vm753, %v891, 0.0
        %908 = vadd.xlane.f32.xlu0 %v907
        %v909 = vpop.xlane.xlu0 %908
        %v910 = vsel %vm753, %v892, 0.0
        %911 = vadd.xlane.f32.xlu0 %v910
        %v912 = vpop.xlane.xlu0 %911
        %v913 = vsel %vm753, %v893, 0.0
        %914 = vadd.xlane.f32.xlu0 %v913
        %v915 = vpop.xlane.xlu0 %914
        %v916 = vsel %vm753, %v894, 0.0
        %917 = vadd.xlane.f32.xlu0 %v916
        %v918 = vpop.xlane.xlu0 %917
        %v919 = vmax.f32 %v897, 1e-09
        %v920 = vmax.f32 %v900, 1e-09
        %v921 = vmax.f32 %v903, 1e-09
        %v922 = vmax.f32 %v906, 1e-09
        %v923 = vmax.f32 %v909, 1e-09
        %v924 = vmax.f32 %v912, 1e-09
        %v925 = vmax.f32 %v915, 1e-09
        %v926 = vmax.f32 %v918, 1e-09
        %v927 = vrcp.pop %v919
        %v928 = vrcp.pop %v920
        %v929 = vrcp.pop %v921
        %v930 = vrcp.pop %v922
        %v931 = vrcp.pop %v923
        %v932 = vrcp.pop %v924
        %v933 = vrcp.pop %v925
        %v934 = vrcp.pop %v926
        %v935 = vmul.f32 %v887, %v927
        %v936 = vmul.f32 %v888, %v928
        %v937 = vmul.f32 %v889, %v929
        %v938 = vmul.f32 %v890, %v930
        %v939 = vmul.f32 %v891, %v931
        %v940 = vmul.f32 %v892, %v932
        %v941 = vmul.f32 %v893, %v933
        %v942 = vmul.f32 %v894, %v934
        %943 = vrot.lane.b32.xlu0 %v680, 112
        %v944 = vpop.permute.xlu0 %943
        %945 = vrot.lane.b32.xlu0 %v682, 112
        %v946 = vpop.permute.xlu0 %945
        %949 = vrot.lane.b32.xlu0 %v680, 96
        %v950 = vpop.permute.xlu0 %949
        %951 = vrot.lane.b32.xlu0 %v682, 96
        %v952 = vpop.permute.xlu0 %951
        %955 = vrot.lane.b32.xlu0 %v680, 80
        %v956 = vpop.permute.xlu0 %955
        %957 = vrot.lane.b32.xlu0 %v682, 80
        %v958 = vpop.permute.xlu0 %957
        %v961 = vpack.c.bf16 %v935, %v935
        %v962 = vpack.c.bf16 %v936, %v936
        %v963 = vpack.c.bf16 %v937, %v937
        %v964 = vpack.c.bf16 %v938, %v938
        %v965 = vpack.c.bf16 %v939, %v939
        %v966 = vpack.c.bf16 %v940, %v940
        %v967 = vpack.c.bf16 %v941, %v941
        %v968 = vpack.c.bf16 %v942, %v942
        %v969 = vpack.c.bf16 %v680, %v680
        %v970 = vpack.c.bf16 %v682, %v682
        %v971 = vpack.c.bf16 %v944, %v944
        %v972 = vpack.c.bf16 %v946, %v946
        %v973 = vpack.c.bf16 %v950, %v950
        %v974 = vpack.c.bf16 %v952, %v952
        %v975 = vpack.c.bf16 %v956, %v956
        %v976 = vpack.c.bf16 %v958, %v958
        %v979 = vunpack.c.l.b16 %v961
        %v980 = vunpack.c.l.b16 %v962
        %v981 = vpack.c.b16 %v980, %v979
        %v984 = vunpack.c.l.b16 %v969
        %v985 = vunpack.c.l.b16 %v970
        %v986 = vpack.c.b16 %v985, %v984
        %v989 = vsel %vm753, %v981, 0
        %991 = vmatpush.bf16.msra.mxu0 0
        %992 = vmatpush.bf16.msra.mxu0 0
        %993 = vmatpush.bf16.msra.mxu0 0
        %994 = vmatpush.bf16.msra.mxu0 0
        %995 = vmatpush.bf16.msra.mxu0 0
        %996 = vmatpush.bf16.msra.mxu0 0
        %997 = vmatpush.bf16.msra.mxu0 0
        %998 = vmatpush.bf16.msra.mxu0 %v986
        %999 = vmatmul.bf16.gmra.mxu0 %v989
        %v1000 = vpop.f32.mrf.mxu0
        %v1001 = vadd.f32 0.0, %v1000
        %v1002 = vpop.f32.mrf.mxu0
        %v1003 = vadd.f32 0.0, %v1002
        %1004 = vdwg.mxu0
        %v1007 = vunpack.c.l.b16 %v963
        %v1008 = vunpack.c.l.b16 %v964
        %v1009 = vpack.c.b16 %v1008, %v1007
        %v1012 = vunpack.c.l.b16 %v971
        %v1013 = vunpack.c.l.b16 %v972
        %v1014 = vpack.c.b16 %v1013, %v1012
        %v1017 = vsel %vm753, %v1009, 0
        %1019 = vmatpush.bf16.msra.mxu0 0
        %1020 = vmatpush.bf16.msra.mxu0 0
        %1021 = vmatpush.bf16.msra.mxu0 0
        %1022 = vmatpush.bf16.msra.mxu0 0
        %1023 = vmatpush.bf16.msra.mxu0 0
        %1024 = vmatpush.bf16.msra.mxu0 0
        %1025 = vmatpush.bf16.msra.mxu0 0
        %1026 = vmatpush.bf16.msra.mxu0 %v1014
        %1027 = vmatmul.bf16.gmra.mxu0 %v1017
        %v1028 = vpop.f32.mrf.mxu0
        %v1029 = vadd.f32 0.0, %v1028
        %v1030 = vpop.f32.mrf.mxu0
        %v1031 = vadd.f32 0.0, %v1030
        %1032 = vdwg.mxu0
        %v1035 = vunpack.c.l.b16 %v965
        %v1036 = vunpack.c.l.b16 %v966
        %v1037 = vpack.c.b16 %v1036, %v1035
        %v1040 = vunpack.c.l.b16 %v973
        %v1041 = vunpack.c.l.b16 %v974
        %v1042 = vpack.c.b16 %v1041, %v1040
        %v1045 = vsel %vm753, %v1037, 0
        %1047 = vmatpush.bf16.msra.mxu0 0
        %1048 = vmatpush.bf16.msra.mxu0 0
        %1049 = vmatpush.bf16.msra.mxu0 0
        %1050 = vmatpush.bf16.msra.mxu0 0
        %1051 = vmatpush.bf16.msra.mxu0 0
        %1052 = vmatpush.bf16.msra.mxu0 0
        %1053 = vmatpush.bf16.msra.mxu0 0
        %1054 = vmatpush.bf16.msra.mxu0 %v1042
        %1055 = vmatmul.bf16.gmra.mxu0 %v1045
        %v1056 = vpop.f32.mrf.mxu0
        %v1057 = vadd.f32 0.0, %v1056
        %v1058 = vpop.f32.mrf.mxu0
        %v1059 = vadd.f32 0.0, %v1058
        %1060 = vdwg.mxu0
        %v1063 = vunpack.c.l.b16 %v967
        %v1064 = vunpack.c.l.b16 %v968
        %v1065 = vpack.c.b16 %v1064, %v1063
        %v1068 = vunpack.c.l.b16 %v975
        %v1069 = vunpack.c.l.b16 %v976
        %v1070 = vpack.c.b16 %v1069, %v1068
        %v1073 = vsel %vm753, %v1065, 0
        %1075 = vmatpush.bf16.msra.mxu0 0
        %1076 = vmatpush.bf16.msra.mxu0 0
        %1077 = vmatpush.bf16.msra.mxu0 0
        %1078 = vmatpush.bf16.msra.mxu0 0
        %1079 = vmatpush.bf16.msra.mxu0 0
        %1080 = vmatpush.bf16.msra.mxu0 0
        %1081 = vmatpush.bf16.msra.mxu0 0
        %1082 = vmatpush.bf16.msra.mxu0 %v1070
        %1083 = vmatmul.bf16.gmra.mxu0 %v1073
        %v1084 = vpop.f32.mrf.mxu0
        %v1085 = vadd.f32 0.0, %v1084
        %v1086 = vpop.f32.mrf.mxu0
        %v1087 = vadd.f32 0.0, %v1086
        %1088 = vdwg.mxu0
        %1091 = vrot.lane.b32.xlu0 %v1029, 16
        %v1092 = vpop.permute.xlu0 %1091
        %1093 = vrot.lane.b32.xlu0 %v1031, 16
        %v1094 = vpop.permute.xlu0 %1093
        %1099 = vrot.lane.b32.xlu0 %v1057, 32
        %v1100 = vpop.permute.xlu0 %1099
        %1101 = vrot.lane.b32.xlu0 %v1059, 32
        %v1102 = vpop.permute.xlu0 %1101
        %1107 = vrot.lane.b32.xlu0 %v1085, 48
        %v1108 = vpop.permute.xlu0 %1107
        %1109 = vrot.lane.b32.xlu0 %v1087, 48
        %v1110 = vpop.permute.xlu0 %1109
        %v1113 = vsel %vm753, %v1001, %v1092
        %v1114 = vsel %vm753, %v1003, %v1094
        %v1115 = vsel %vm663, %v1113, %v1100
        %v1116 = vsel %vm663, %v1114, %v1102
        %vm1117 = vcmask 392192
        %v1118 = vsel %vm1117, %v1115, %v1108
        %v1119 = vsel %vm1117, %v1116, %v1110
        %1122 = vrot.lane.b32.xlu0 %v685, 64
        %v1123 = vpop.permute.xlu0 %1122
        %1124 = vrot.lane.b32.xlu0 %v687, 64
        %v1125 = vpop.permute.xlu0 %1124
        %v1128 = vsel %vm698, %v1118, %v1123
        %v1129 = vsel %vm698, %v1119, %v1125
        %1130 = vst [vmem:[%s624] sm:$0xff] %v1128
        %1131 = vst [vmem:[%s624 + $0x8] sm:$0xff] %v1129
        %s1132 = sand.u32 %s280, 1
        %s1133 = scalar_lea.sflag [#allocation4], %s1132
        %s1134 = sand.u32 %s280, 1
        %s1135 = smul.addr %s1134, 16
        %s1136 = scalar_lea.vmem [#allocation16], %s1135
        // Predicated region
        $region89: #{tpu_custom_call.1} parent=55 // pred_check
          %p1137 = pneg %p290
        $region90: #{tpu_custom_call.1} parent=55 // pred_check_branch
          %1139 = sbr.rel (%p1137) target = $region92
        $region91: #{tpu_custom_call.1} parent=55 // pred_region
          %1141 = vsyncadd %s1133, 0
          %s1142 = smul.addr %s38, 2
          %s1143 = smul.addr %s1142, 8
          %s1144 = scalar_lea.hbm %s9, %s1143
          %s1145 = sshll.u32 %s1136, 4
          %s1146 = int_to_ptr.vmem [resolvable:$true] %s1145
          %s1147 = sshll.u32 %s1144, 4
          %s1148 = int_to_ptr.hbm [resolvable:$true] %s1147
          %1153 = dma.vmem_to_hbm [thread:$0]  %s1146, 256, %s1148, %s1133, 128, 128, 8
        $region92: #{tpu_custom_call.1} parent=55 // pred_fallthru
          _
      $region56: #{tpu_custom_call.1} parent=5 // pred_fallthru
        _
      %p1154 = scmp.le.s32.totalorder 2, %s33
      // Predicated region
      $region93: #{tpu_custom_call.1} parent=5 // pred_check
        %p1155 = pneg %p1154
      $region94: #{tpu_custom_call.1} parent=5 // pred_check_branch
        %1157 = sbr.rel (%p1155) target = $region96
      $region95: #{tpu_custom_call.1} parent=5 // pred_region
        %s1158 = ssub.s32 %s33, 2
        // Predicated region
        $region97: #{tpu_custom_call.1} parent=95 // pred_check
          %p1159 = pneg %p296
        $region98: #{tpu_custom_call.1} parent=95 // pred_check_branch
          %1161 = sbr.rel (%p1159) target = $region100
        $region99: #{tpu_custom_call.1} parent=95 // pred_region
          %s1162 = sand.u32 %s281, 1
          %s1163 = scalar_lea.sflag [#allocation4], %s1162
          %s1164 = sand.u32 %s281, 1
          %s1165 = smul.addr %s1164, 16
          %s1166 = scalar_lea.vmem [#allocation16], %s1165
          %1168 = dma.done %s1163, 256
        $region100: #{tpu_custom_call.1} parent=95 // pred_fallthru
          _
      $region96: #{tpu_custom_call.1} parent=5 // pred_fallthru
        _
    $region6: #{tpu_custom_call.1} parent=1 // loop_footer
      %s37 = sadd.s32 1, %s33
    $region7: #{tpu_custom_call.1} parent=1 // loop_footer_branch
      %32 = sbr.rel target = $region3
    $region8: #{tpu_custom_call.1} parent=1 // loop_exit
      _
    %1169 = vsyncpa [#allocation3], 1
    %s1170 = scalar_lea.sflag [#allocation3], 1
    %1171 = vsyncpa %s1170, 1
    %1172 = vsyncpa [#allocation6], 1
    %s1173 = scalar_lea.sflag [#allocation6], 1
    %1174 = vsyncpa %s1173, 1
    %1175 = vsyncpa [#allocation9], 1
    %s1176 = scalar_lea.sflag [#allocation9], 1
    %1177 = vsyncpa %s1176, 1
    %1178 = vsyncpa [#allocation12], 1
    %s1179 = scalar_lea.sflag [#allocation12], 1
    %1180 = vsyncpa %s1179, 1
    %1181 = vsyncpa [#allocation15], 1
    %s1182 = scalar_lea.sflag [#allocation15], 1
    %1183 = vsyncpa %s1182, 1
    %1184 = vsyncpa [#allocation4], 1
    %s1185 = scalar_lea.sflag [#allocation4], 1
    %1186 = vsyncpa %s1185, 1

</llo_original>
